<compile_context>
chip_gen: v7x
topology: tpu7x:2x2x1
jax: 0.10.0
libtpu: 0.0.40
codegen_flags: <defaults>
</compile_context>

<pallas_src>
import functools

import jax
import jax.numpy as jnp
from jax.experimental import pallas as pl
from jax.experimental.pallas import tpu as pltpu


# ----------------------------- Pallas kernel ------------------------------- #

def decoder_kernel(emb_ref, w1_ref, b1_ref, w2_ref, b2_ref, o_ref,
                   *, n_in, n_chunks, chunk):
    """Fused fc1(VPU) -> ReLU -> fc2(MXU, H-chunked) -> softmax for one row tile.

    emb_ref : (TM, n_in)      f32
    w1_ref  : (n_in, H_pad)   f32   (padded H columns are zero)
    b1_ref  : (1, H_pad)      f32   (padded entries zero)
    w2_ref  : (H_pad, 128)    bf16  (padded rows / class columns are zero)
    b2_ref  : (1, 128)        f32   (padded class lanes = -1e30)
    o_ref   : (TM, 128)       f32   (lane-dense; wrapper slices [:, :10])
    """
    TM, NP = o_ref.shape

    # Load the (TM, 1) embedding columns once; reused by every H chunk.
    e_cols = [emb_ref[:, k:k + 1] for k in range(n_in)]

    acc = jnp.zeros((TM, NP), jnp.float32)
    for c in range(n_chunks):                     # static unroll (n_chunks = 5)
        lo = c * chunk
        hi = lo + chunk
        # fc1 + bias + ReLU for this chunk: pure f32 VPU broadcast mul-adds.
        h = b1_ref[:, lo:hi]
        for k in range(n_in):
            h = h + e_cols[k] * w1_ref[k:k + 1, lo:hi]
        h = jnp.maximum(h, 0.0).astype(jnp.bfloat16)
        # fc2 chunk on the MXU (bf16 operands, f32 accumulation).
        acc = acc + jnp.dot(h, w2_ref[lo:hi, :],
                            preferred_element_type=jnp.float32)

    # Masked bias: padded lanes get -1e30 -> exp underflows to exactly 0, so
    # the normalization matches a 10-class softmax.
    logits = acc + b2_ref[...]
    m = jnp.max(logits, axis=-1, keepdims=True)
    ex = jnp.exp(logits - m)
    inv = pl.reciprocal(jnp.sum(ex, axis=-1, keepdims=True), approx=False)
    o_ref[...] = (ex * inv).astype(o_ref.dtype)


# ------------------------------ host wrapper ------------------------------- #

def _round_up(x, m):
    return (x + m - 1) // m * m


def embedding_decoder_forward(emb, params, *, block_m=256):
    """Mirrors EmbeddingDecoder.forward. emb: (B, 3) f32 -> (B, 10) softmax."""
    B, Kin = emb.shape
    H = params["fc1_w"].shape[1]                  # 7*7*64 = 3136
    N = params["fc2_w"].shape[1]                  # 10
    NP = 128                                      # lane-dense padded classes
    H_pad = _round_up(H, 128)                     # 3136 -> 3200

    # H-chunk width: largest multiple of 128 (<= 640) that divides H_pad.
    CH = H_pad
    for c in range(640, 127, -128):
        if H_pad % c == 0:
            CH = c
            break
    n_chunks = H_pad // CH

    # Batch row tile: multiple of 8.  For large batches keep >= 2 grid steps
    # (v7x has 2 TensorCores) while minimizing batch padding.
    B8 = _round_up(B, 8)
    if B8 <= block_m:
        TM = B8
    else:
        TM = min(block_m, _round_up(-(-B8 // 2), 8))
    B_pad = _round_up(B8, TM)

    # One-time padding / casts (constant-folded under jit with fixed params).
    emb_p = jnp.zeros((B_pad, Kin), jnp.float32).at[:B, :].set(
        emb.astype(jnp.float32))
    w1_p = jnp.zeros((Kin, H_pad), jnp.float32).at[:, :H].set(
        params["fc1_w"].astype(jnp.float32))
    b1_p = jnp.zeros((1, H_pad), jnp.float32).at[0, :H].set(
        params["fc1_b"].astype(jnp.float32))
    w2_p = jnp.zeros((H_pad, NP), jnp.bfloat16).at[:H, :N].set(
        params["fc2_w"].astype(jnp.bfloat16))
    b2_p = jnp.full((1, NP), -1e30, jnp.float32).at[0, :N].set(
        params["fc2_b"].astype(jnp.float32))

    cost = pl.CostEstimate(
        flops=int(2 * B_pad * H_pad * (Kin + NP)),
        transcendentals=int(B_pad * NP),
        bytes_accessed=int(4 * (emb_p.size + w1_p.size + b1_p.size
                                + b2_p.size + B_pad * NP)
                           + 2 * w2_p.size),
    )

    kernel = functools.partial(decoder_kernel,
                               n_in=Kin, n_chunks=n_chunks, chunk=CH)

    out = pl.pallas_call(
        kernel,
        out_shape=jax.ShapeDtypeStruct((B_pad, NP), jnp.float32),
        grid=(B_pad // TM,),
        in_specs=[
            pl.BlockSpec((TM, Kin), lambda i: (i, 0)),     # embedding row tile
            pl.BlockSpec((Kin, H_pad), lambda i: (0, 0)),  # fc1 weight (resident)
            pl.BlockSpec((1, H_pad), lambda i: (0, 0)),    # fc1 bias
            pl.BlockSpec((H_pad, NP), lambda i: (0, 0)),   # fc2 weight (resident)
            pl.BlockSpec((1, NP), lambda i: (0, 0)),       # fc2 bias (masked pad)
        ],
        out_specs=pl.BlockSpec((TM, NP), lambda i: (i, 0)),
        compiler_params=pltpu.CompilerParams(
            dimension_semantics=("parallel",)),
        cost_estimate=cost,
    )(emb_p, w1_p, b1_p, w2_p, b2_p)

    return out[:B, :N]


# ------------------------------ pure-JAX reference ------------------------- #

def reference_forward(emb, p):
    x = jax.nn.relu(emb @ p["fc1_w"] + p["fc1_b"])
    x = x.reshape(-1, p["fc1_w"].shape[1])        # .view(-1, 7*7*64) (no-op)
    x = x @ p["fc2_w"] + p["fc2_b"]
    return jax.nn.softmax(x, axis=1)


# ----------------------------------- main ----------------------------------- #

if __name__ == "__main__":
    H = 7 * 7 * 64   # 3136
    key = jax.random.PRNGKey(0)
    ks = jax.random.split(key, 5)

    # Deterministic synthetic parameters. PyTorch nn.Linear(in, out) computes
    # x @ W.T + b with W of shape (out, in); we store weights as (in, out).
    params = {
        "fc1_w": 0.05 * jax.random.normal(ks[0], (3, H), jnp.float32),
        "fc1_b": 0.05 * jax.random.normal(ks[1], (H,), jnp.float32),
        "fc2_w": 0.02 * jax.random.normal(ks[2], (H, 10), jnp.float32),
        "fc2_b": 0.05 * jax.random.normal(ks[3], (10,), jnp.float32),
    }

    emb = jax.random.normal(ks[4], (2, 3), jnp.float32)   # B=2 embeddings

    out = jax.jit(embedding_decoder_forward)(emb, params)
    out = jax.block_until_ready(out)
    assert out.shape == (2, 10) and out.dtype == jnp.float32

    # Rows are softmax distributions.
    assert jnp.allclose(jnp.sum(out, axis=1), 1.0, atol=1e-4)

    ref = jax.block_until_ready(reference_forward(emb, params))
    # Only fc2 operands (hidden activations + w2) are bf16 on the MXU; fc1 is
    # full f32 on the VPU, so the tolerance comfortably covers the cast error.
    assert jnp.allclose(out, ref, rtol=5e-3, atol=5e-3), (out, ref)

    print("KERNEL_OK")
</pallas_src>

<mosaic_0001>
module attributes {stable_mosaic.version = 11 : i64} {
  func.func @decoder_kernel(%arg0: i32, %arg1: memref<8x3xf32, #tpu.memory_space<vmem>>, %arg2: memref<3x3200xf32, #tpu.memory_space<vmem>>, %arg3: memref<1x3200xf32, #tpu.memory_space<vmem>>, %arg4: memref<3200x128xbf16, #tpu.memory_space<vmem>>, %arg5: memref<1x128xf32, #tpu.memory_space<vmem>>, %arg6: memref<8x128xf32, #tpu.memory_space<vmem>>) attributes {dimension_semantics = [#tpu.dimension_semantics<parallel>], iteration_bounds = array<i64: 1>, scalar_prefetch = 0 : i64, scratch_operands = 0 : i64, tpu.core_type = #tpu.core_type<tc>, window_params = [{transform_indices = @transform_0, window_bounds = array<i64: 8, 3>}, {pipeline_mode = #tpu.pipeline_mode<synchronous>, transform_indices = @transform_1, window_bounds = array<i64: 3, 3200>}, {pipeline_mode = #tpu.pipeline_mode<synchronous>, transform_indices = @transform_2, window_bounds = array<i64: 1, 3200>}, {pipeline_mode = #tpu.pipeline_mode<synchronous>, transform_indices = @transform_3, window_bounds = array<i64: 3200, 128>}, {pipeline_mode = #tpu.pipeline_mode<synchronous>, transform_indices = @transform_4, window_bounds = array<i64: 1, 128>}, {transform_indices = @transform_5, window_bounds = array<i64: 8, 128>}]} {
    %c0 = arith.constant 0 : index
    %c0_0 = arith.constant 0 : index
    %0 = vector.load %arg1[%c0, %c0_0] : memref<8x3xf32, #tpu.memory_space<vmem>>, vector<8x1xf32>
    %c0_1 = arith.constant 0 : index
    %c1 = arith.constant 1 : index
    %1 = vector.load %arg1[%c0_1, %c1] : memref<8x3xf32, #tpu.memory_space<vmem>>, vector<8x1xf32>
    %c0_2 = arith.constant 0 : index
    %c2 = arith.constant 2 : index
    %2 = vector.load %arg1[%c0_2, %c2] : memref<8x3xf32, #tpu.memory_space<vmem>>, vector<8x1xf32>
    %cst = arith.constant 0.000000e+00 : f32
    %3 = vector.broadcast %cst : f32 to vector<8x128xf32>
    %c0_3 = arith.constant 0 : index
    %c0_4 = arith.constant 0 : index
    %4 = vector.load %arg3[%c0_3, %c0_4] : memref<1x3200xf32, #tpu.memory_space<vmem>>, vector<1x640xf32>
    %c0_5 = arith.constant 0 : index
    %c0_6 = arith.constant 0 : index
    %5 = vector.load %arg2[%c0_5, %c0_6] : memref<3x3200xf32, #tpu.memory_space<vmem>>, vector<1x640xf32>
    %6 = vector.broadcast %0 : vector<8x1xf32> to vector<8x640xf32>
    %7 = vector.broadcast %5 : vector<1x640xf32> to vector<8x640xf32>
    %8 = arith.mulf %6, %7 : vector<8x640xf32>
    %9 = vector.broadcast %4 : vector<1x640xf32> to vector<8x640xf32>
    %10 = arith.addf %9, %8 : vector<8x640xf32>
    %c1_7 = arith.constant 1 : index
    %c0_8 = arith.constant 0 : index
    %11 = vector.load %arg2[%c1_7, %c0_8] : memref<3x3200xf32, #tpu.memory_space<vmem>>, vector<1x640xf32>
    %12 = vector.broadcast %1 : vector<8x1xf32> to vector<8x640xf32>
    %13 = vector.broadcast %11 : vector<1x640xf32> to vector<8x640xf32>
    %14 = arith.mulf %12, %13 : vector<8x640xf32>
    %15 = arith.addf %10, %14 : vector<8x640xf32>
    %c2_9 = arith.constant 2 : index
    %c0_10 = arith.constant 0 : index
    %16 = vector.load %arg2[%c2_9, %c0_10] : memref<3x3200xf32, #tpu.memory_space<vmem>>, vector<1x640xf32>
    %17 = vector.broadcast %2 : vector<8x1xf32> to vector<8x640xf32>
    %18 = vector.broadcast %16 : vector<1x640xf32> to vector<8x640xf32>
    %19 = arith.mulf %17, %18 : vector<8x640xf32>
    %20 = arith.addf %15, %19 : vector<8x640xf32>
    %cst_11 = arith.constant 0.000000e+00 : f32
    %21 = vector.broadcast %cst_11 : f32 to vector<8x640xf32>
    %22 = arith.maximumf %20, %21 : vector<8x640xf32>
    %23 = arith.truncf %22 : vector<8x640xf32> to vector<8x640xbf16>
    %c0_12 = arith.constant 0 : index
    %c0_13 = arith.constant 0 : index
    %24 = vector.load %arg4[%c0_12, %c0_13] : memref<3200x128xbf16, #tpu.memory_space<vmem>>, vector<640x128xbf16>
    %cst_14 = arith.constant dense<0.000000e+00> : vector<8x128xf32>
    %25 = tpu.matmul %23, %24, %cst_14 {dimension_numbers = #tpu.dot_dimension_numbers<[1], [0], [0], [1], [0, 0, 1, 1], [], []>} : vector<8x640xbf16>, vector<640x128xbf16>, vector<8x128xf32> -> vector<8x128xf32>
    %26 = arith.addf %3, %25 : vector<8x128xf32>
    %c0_15 = arith.constant 0 : index
    %c640 = arith.constant 640 : index
    %27 = vector.load %arg3[%c0_15, %c640] : memref<1x3200xf32, #tpu.memory_space<vmem>>, vector<1x640xf32>
    %c0_16 = arith.constant 0 : index
    %c640_17 = arith.constant 640 : index
    %28 = vector.load %arg2[%c0_16, %c640_17] : memref<3x3200xf32, #tpu.memory_space<vmem>>, vector<1x640xf32>
    %29 = vector.broadcast %0 : vector<8x1xf32> to vector<8x640xf32>
    %30 = vector.broadcast %28 : vector<1x640xf32> to vector<8x640xf32>
    %31 = arith.mulf %29, %30 : vector<8x640xf32>
    %32 = vector.broadcast %27 : vector<1x640xf32> to vector<8x640xf32>
    %33 = arith.addf %32, %31 : vector<8x640xf32>
    %c1_18 = arith.constant 1 : index
    %c640_19 = arith.constant 640 : index
    %34 = vector.load %arg2[%c1_18, %c640_19] : memref<3x3200xf32, #tpu.memory_space<vmem>>, vector<1x640xf32>
    %35 = vector.broadcast %1 : vector<8x1xf32> to vector<8x640xf32>
    %36 = vector.broadcast %34 : vector<1x640xf32> to vector<8x640xf32>
    %37 = arith.mulf %35, %36 : vector<8x640xf32>
    %38 = arith.addf %33, %37 : vector<8x640xf32>
    %c2_20 = arith.constant 2 : index
    %c640_21 = arith.constant 640 : index
    %39 = vector.load %arg2[%c2_20, %c640_21] : memref<3x3200xf32, #tpu.memory_space<vmem>>, vector<1x640xf32>
    %40 = vector.broadcast %2 : vector<8x1xf32> to vector<8x640xf32>
    %41 = vector.broadcast %39 : vector<1x640xf32> to vector<8x640xf32>
    %42 = arith.mulf %40, %41 : vector<8x640xf32>
    %43 = arith.addf %38, %42 : vector<8x640xf32>
    %cst_22 = arith.constant 0.000000e+00 : f32
    %44 = vector.broadcast %cst_22 : f32 to vector<8x640xf32>
    %45 = arith.maximumf %43, %44 : vector<8x640xf32>
    %46 = arith.truncf %45 : vector<8x640xf32> to vector<8x640xbf16>
    %c640_23 = arith.constant 640 : index
    %c0_24 = arith.constant 0 : index
    %47 = vector.load %arg4[%c640_23, %c0_24] : memref<3200x128xbf16, #tpu.memory_space<vmem>>, vector<640x128xbf16>
    %cst_25 = arith.constant dense<0.000000e+00> : vector<8x128xf32>
    %48 = tpu.matmul %46, %47, %cst_25 {dimension_numbers = #tpu.dot_dimension_numbers<[1], [0], [0], [1], [0, 0, 1, 1], [], []>} : vector<8x640xbf16>, vector<640x128xbf16>, vector<8x128xf32> -> vector<8x128xf32>
    %49 = arith.addf %26, %48 : vector<8x128xf32>
    %c0_26 = arith.constant 0 : index
    %c1280 = arith.constant 1280 : index
    %50 = vector.load %arg3[%c0_26, %c1280] : memref<1x3200xf32, #tpu.memory_space<vmem>>, vector<1x640xf32>
    %c0_27 = arith.constant 0 : index
    %c1280_28 = arith.constant 1280 : index
    %51 = vector.load %arg2[%c0_27, %c1280_28] : memref<3x3200xf32, #tpu.memory_space<vmem>>, vector<1x640xf32>
    %52 = vector.broadcast %0 : vector<8x1xf32> to vector<8x640xf32>
    %53 = vector.broadcast %51 : vector<1x640xf32> to vector<8x640xf32>
    %54 = arith.mulf %52, %53 : vector<8x640xf32>
    %55 = vector.broadcast %50 : vector<1x640xf32> to vector<8x640xf32>
    %56 = arith.addf %55, %54 : vector<8x640xf32>
    %c1_29 = arith.constant 1 : index
    %c1280_30 = arith.constant 1280 : index
    %57 = vector.load %arg2[%c1_29, %c1280_30] : memref<3x3200xf32, #tpu.memory_space<vmem>>, vector<1x640xf32>
    %58 = vector.broadcast %1 : vector<8x1xf32> to vector<8x640xf32>
    %59 = vector.broadcast %57 : vector<1x640xf32> to vector<8x640xf32>
    %60 = arith.mulf %58, %59 : vector<8x640xf32>
    %61 = arith.addf %56, %60 : vector<8x640xf32>
    %c2_31 = arith.constant 2 : index
    %c1280_32 = arith.constant 1280 : index
    %62 = vector.load %arg2[%c2_31, %c1280_32] : memref<3x3200xf32, #tpu.memory_space<vmem>>, vector<1x640xf32>
    %63 = vector.broadcast %2 : vector<8x1xf32> to vector<8x640xf32>
    %64 = vector.broadcast %62 : vector<1x640xf32> to vector<8x640xf32>
    %65 = arith.mulf %63, %64 : vector<8x640xf32>
    %66 = arith.addf %61, %65 : vector<8x640xf32>
    %cst_33 = arith.constant 0.000000e+00 : f32
    %67 = vector.broadcast %cst_33 : f32 to vector<8x640xf32>
    %68 = arith.maximumf %66, %67 : vector<8x640xf32>
    %69 = arith.truncf %68 : vector<8x640xf32> to vector<8x640xbf16>
    %c1280_34 = arith.constant 1280 : index
    %c0_35 = arith.constant 0 : index
    %70 = vector.load %arg4[%c1280_34, %c0_35] : memref<3200x128xbf16, #tpu.memory_space<vmem>>, vector<640x128xbf16>
    %cst_36 = arith.constant dense<0.000000e+00> : vector<8x128xf32>
    %71 = tpu.matmul %69, %70, %cst_36 {dimension_numbers = #tpu.dot_dimension_numbers<[1], [0], [0], [1], [0, 0, 1, 1], [], []>} : vector<8x640xbf16>, vector<640x128xbf16>, vector<8x128xf32> -> vector<8x128xf32>
    %72 = arith.addf %49, %71 : vector<8x128xf32>
    %c0_37 = arith.constant 0 : index
    %c1920 = arith.constant 1920 : index
    %73 = vector.load %arg3[%c0_37, %c1920] : memref<1x3200xf32, #tpu.memory_space<vmem>>, vector<1x640xf32>
    %c0_38 = arith.constant 0 : index
    %c1920_39 = arith.constant 1920 : index
    %74 = vector.load %arg2[%c0_38, %c1920_39] : memref<3x3200xf32, #tpu.memory_space<vmem>>, vector<1x640xf32>
    %75 = vector.broadcast %0 : vector<8x1xf32> to vector<8x640xf32>
    %76 = vector.broadcast %74 : vector<1x640xf32> to vector<8x640xf32>
    %77 = arith.mulf %75, %76 : vector<8x640xf32>
    %78 = vector.broadcast %73 : vector<1x640xf32> to vector<8x640xf32>
    %79 = arith.addf %78, %77 : vector<8x640xf32>
    %c1_40 = arith.constant 1 : index
    %c1920_41 = arith.constant 1920 : index
    %80 = vector.load %arg2[%c1_40, %c1920_41] : memref<3x3200xf32, #tpu.memory_space<vmem>>, vector<1x640xf32>
    %81 = vector.broadcast %1 : vector<8x1xf32> to vector<8x640xf32>
    %82 = vector.broadcast %80 : vector<1x640xf32> to vector<8x640xf32>
    %83 = arith.mulf %81, %82 : vector<8x640xf32>
    %84 = arith.addf %79, %83 : vector<8x640xf32>
    %c2_42 = arith.constant 2 : index
    %c1920_43 = arith.constant 1920 : index
    %85 = vector.load %arg2[%c2_42, %c1920_43] : memref<3x3200xf32, #tpu.memory_space<vmem>>, vector<1x640xf32>
    %86 = vector.broadcast %2 : vector<8x1xf32> to vector<8x640xf32>
    %87 = vector.broadcast %85 : vector<1x640xf32> to vector<8x640xf32>
    %88 = arith.mulf %86, %87 : vector<8x640xf32>
    %89 = arith.addf %84, %88 : vector<8x640xf32>
    %cst_44 = arith.constant 0.000000e+00 : f32
    %90 = vector.broadcast %cst_44 : f32 to vector<8x640xf32>
    %91 = arith.maximumf %89, %90 : vector<8x640xf32>
    %92 = arith.truncf %91 : vector<8x640xf32> to vector<8x640xbf16>
    %c1920_45 = arith.constant 1920 : index
    %c0_46 = arith.constant 0 : index
    %93 = vector.load %arg4[%c1920_45, %c0_46] : memref<3200x128xbf16, #tpu.memory_space<vmem>>, vector<640x128xbf16>
    %cst_47 = arith.constant dense<0.000000e+00> : vector<8x128xf32>
    %94 = tpu.matmul %92, %93, %cst_47 {dimension_numbers = #tpu.dot_dimension_numbers<[1], [0], [0], [1], [0, 0, 1, 1], [], []>} : vector<8x640xbf16>, vector<640x128xbf16>, vector<8x128xf32> -> vector<8x128xf32>
    %95 = arith.addf %72, %94 : vector<8x128xf32>
    %c0_48 = arith.constant 0 : index
    %c2560 = arith.constant 2560 : index
    %96 = vector.load %arg3[%c0_48, %c2560] : memref<1x3200xf32, #tpu.memory_space<vmem>>, vector<1x640xf32>
    %c0_49 = arith.constant 0 : index
    %c2560_50 = arith.constant 2560 : index
    %97 = vector.load %arg2[%c0_49, %c2560_50] : memref<3x3200xf32, #tpu.memory_space<vmem>>, vector<1x640xf32>
    %98 = vector.broadcast %0 : vector<8x1xf32> to vector<8x640xf32>
    %99 = vector.broadcast %97 : vector<1x640xf32> to vector<8x640xf32>
    %100 = arith.mulf %98, %99 : vector<8x640xf32>
    %101 = vector.broadcast %96 : vector<1x640xf32> to vector<8x640xf32>
    %102 = arith.addf %101, %100 : vector<8x640xf32>
    %c1_51 = arith.constant 1 : index
    %c2560_52 = arith.constant 2560 : index
    %103 = vector.load %arg2[%c1_51, %c2560_52] : memref<3x3200xf32, #tpu.memory_space<vmem>>, vector<1x640xf32>
    %104 = vector.broadcast %1 : vector<8x1xf32> to vector<8x640xf32>
    %105 = vector.broadcast %103 : vector<1x640xf32> to vector<8x640xf32>
    %106 = arith.mulf %104, %105 : vector<8x640xf32>
    %107 = arith.addf %102, %106 : vector<8x640xf32>
    %c2_53 = arith.constant 2 : index
    %c2560_54 = arith.constant 2560 : index
    %108 = vector.load %arg2[%c2_53, %c2560_54] : memref<3x3200xf32, #tpu.memory_space<vmem>>, vector<1x640xf32>
    %109 = vector.broadcast %2 : vector<8x1xf32> to vector<8x640xf32>
    %110 = vector.broadcast %108 : vector<1x640xf32> to vector<8x640xf32>
    %111 = arith.mulf %109, %110 : vector<8x640xf32>
    %112 = arith.addf %107, %111 : vector<8x640xf32>
    %cst_55 = arith.constant 0.000000e+00 : f32
    %113 = vector.broadcast %cst_55 : f32 to vector<8x640xf32>
    %114 = arith.maximumf %112, %113 : vector<8x640xf32>
    %115 = arith.truncf %114 : vector<8x640xf32> to vector<8x640xbf16>
    %c2560_56 = arith.constant 2560 : index
    %c0_57 = arith.constant 0 : index
    %116 = vector.load %arg4[%c2560_56, %c0_57] : memref<3200x128xbf16, #tpu.memory_space<vmem>>, vector<640x128xbf16>
    %cst_58 = arith.constant dense<0.000000e+00> : vector<8x128xf32>
    %117 = tpu.matmul %115, %116, %cst_58 {dimension_numbers = #tpu.dot_dimension_numbers<[1], [0], [0], [1], [0, 0, 1, 1], [], []>} : vector<8x640xbf16>, vector<640x128xbf16>, vector<8x128xf32> -> vector<8x128xf32>
    %118 = arith.addf %95, %117 : vector<8x128xf32>
    %c0_59 = arith.constant 0 : index
    %c0_60 = arith.constant 0 : index
    %119 = vector.load %arg5[%c0_59, %c0_60] : memref<1x128xf32, #tpu.memory_space<vmem>>, vector<1x128xf32>
    %120 = vector.broadcast %119 : vector<1x128xf32> to vector<8x128xf32>
    %121 = arith.addf %118, %120 : vector<8x128xf32>
    %cst_61 = arith.constant dense<0xFF800000> : vector<8xf32>
    %122 = vector.multi_reduction <maximumf>, %121, %cst_61 [1] : vector<8x128xf32> to vector<8xf32>
    %123 = vector.shape_cast %122 : vector<8xf32> to vector<8x1xf32>
    %124 = vector.broadcast %123 : vector<8x1xf32> to vector<8x128xf32>
    %125 = arith.subf %121, %124 : vector<8x128xf32>
    %126 = math.exp %125 : vector<8x128xf32>
    %cst_62 = arith.constant dense<0.000000e+00> : vector<8xf32>
    %127 = vector.multi_reduction <add>, %126, %cst_62 [1] : vector<8x128xf32> to vector<8xf32>
    %128 = vector.shape_cast %127 : vector<8xf32> to vector<8x1xf32>
    %129 = tpu.reciprocal %128 : vector<8x1xf32> -> vector<8x1xf32>
    %130 = vector.broadcast %129 : vector<8x1xf32> to vector<8x128xf32>
    %131 = arith.mulf %126, %130 : vector<8x128xf32>
    %c0_63 = arith.constant 0 : index
    %c0_64 = arith.constant 0 : index
    %132 = vector.load %arg6[%c0_63, %c0_64] : memref<8x128xf32, #tpu.memory_space<vmem>>, vector<8x128xf32>
    tpu.vector_store %arg6[%c0_63, %c0_64], %131 {strides = array<i32>} : memref<8x128xf32, #tpu.memory_space<vmem>>, vector<8x128xf32>,
    return
  }
  func.func @transform_0(%arg0: i32) -> (i32, i32) {
    %c0_i32 = arith.constant 0 : i32
    %c0_i32_0 = arith.constant 0 : i32
    return %arg0, %c0_i32 : i32, i32
  }
  func.func @transform_1(%arg0: i32) -> (i32, i32) {
    %c0_i32 = arith.constant 0 : i32
    %c0_i32_0 = arith.constant 0 : i32
    %c0_i32_1 = arith.constant 0 : i32
    return %c0_i32, %c0_i32_0 : i32, i32
  }
  func.func @transform_2(%arg0: i32) -> (i32, i32) {
    %c0_i32 = arith.constant 0 : i32
    %c0_i32_0 = arith.constant 0 : i32
    %c0_i32_1 = arith.constant 0 : i32
    return %c0_i32, %c0_i32_0 : i32, i32
  }
  func.func @transform_3(%arg0: i32) -> (i32, i32) {
    %c0_i32 = arith.constant 0 : i32
    %c0_i32_0 = arith.constant 0 : i32
    %c0_i32_1 = arith.constant 0 : i32
    return %c0_i32, %c0_i32_0 : i32, i32
  }
  func.func @transform_4(%arg0: i32) -> (i32, i32) {
    %c0_i32 = arith.constant 0 : i32
    %c0_i32_0 = arith.constant 0 : i32
    %c0_i32_1 = arith.constant 0 : i32
    return %c0_i32, %c0_i32_0 : i32, i32
  }
  func.func @transform_5(%arg0: i32) -> (i32, i32) {
    %c0_i32 = arith.constant 0 : i32
    %c0_i32_0 = arith.constant 0 : i32
    return %arg0, %c0_i32 : i32, i32
  }
}

</mosaic_0001>

<llo_original>
// kernel: embedding_decoder_forward.1
$region0: #{embedding_decoder_forward.1}
  #allocation0 [shape = 'u32[]', space=smem, size = 0x4, offset = 0x4, fixed_abs, tag = 'smem constant byte address 0x4 - core index']
  #allocation1 [shape = 'u32[144,128]{1,0:T(1,128)}', space=vmem, size = 0x12000, scoped, tag = 'internal scratch']
  %s0 = inlined_call_operand.vmem [shape: f32[8,3], index: 0, kind: input, shape index: {}]
  %s1 = inlined_call_operand.vmem [shape: f32[3,3200], index: 1, kind: input, shape index: {}]
  %s2 = inlined_call_operand.vmem [shape: f32[1,3200], index: 2, kind: input, shape index: {}]
  %s3 = inlined_call_operand.vmem [shape: bf16[3200,128], index: 3, kind: input, shape index: {}]
  %s4 = inlined_call_operand.vmem [shape: f32[1,128], index: 4, kind: input, shape index: {}]
  %s5 = inlined_call_operand.vmem [shape: f32[8,128], index: 5, kind: output, shape index: {}]
  %s6 = sld [smem:[#allocation0]]
  $region30: #{embedding_decoder_forward.1} parent=0
    _
  %s8 = ssub.s32 1, %s6
  %s9 = scalar_select 0, %s8, %s6
  // Predicated region
  $region2: #{embedding_decoder_forward.1} parent=0 // pred_check
    _
  $region3: #{embedding_decoder_forward.1} parent=0 // pred_check_branch
    %11 = sbr.rel (0) target = $region5
  $region4: #{embedding_decoder_forward.1} parent=0 // pred_region
    _
  $region5: #{embedding_decoder_forward.1} parent=0 // pred_fallthru
    _
  // Predicated region
  $region6: #{embedding_decoder_forward.1} parent=0 // pred_check
    _
  $region7: #{embedding_decoder_forward.1} parent=0 // pred_check_branch
    %13 = sbr.rel (0) target = $region9
  $region8: #{embedding_decoder_forward.1} parent=0 // pred_region
    _
  $region9: #{embedding_decoder_forward.1} parent=0 // pred_fallthru
    _
  // Predicated region
  $region10: #{embedding_decoder_forward.1} parent=0 // pred_check
    _
  $region11: #{embedding_decoder_forward.1} parent=0 // pred_check_branch
    %15 = sbr.rel (0) target = $region13
  $region12: #{embedding_decoder_forward.1} parent=0 // pred_region
    _
  $region13: #{embedding_decoder_forward.1} parent=0 // pred_fallthru
    _
  // Predicated region
  $region14: #{embedding_decoder_forward.1} parent=0 // pred_check
    _
  $region15: #{embedding_decoder_forward.1} parent=0 // pred_check_branch
    %17 = sbr.rel (0) target = $region17
  $region16: #{embedding_decoder_forward.1} parent=0 // pred_region
    _
  $region17: #{embedding_decoder_forward.1} parent=0 // pred_fallthru
    _
  // Predicated region
  $region18: #{embedding_decoder_forward.1} parent=0 // pred_check
    _
  $region19: #{embedding_decoder_forward.1} parent=0 // pred_check_branch
    %19 = sbr.rel (0) target = $region21
  $region20: #{embedding_decoder_forward.1} parent=0 // pred_region
    _
  $region21: #{embedding_decoder_forward.1} parent=0 // pred_fallthru
    _
  %v21 = vld [vmem:[%s0] sm:$0xff]
  %v22 = vld [vmem:[%s2] sm:$0x1f]
  %v23 = vld [vmem:[%s1] ss:$4 sm:$0x1f]
  %25 = vset.pattern.permute.xlu0 0
  %26 = vperm.xlu0 %25, %v21
  %v27 = vpop.permute.xlu0 %26
  %v30 = vlaneseq
  %v31 = vshrl.u32 %v30, 7
  %v32 = vsub.s32 0, %v31
  %v33 = vrot.slane %v23, %v32
  %v34 = vlaneseq
  %v35 = vshrl.u32 %v34, 7
  %v36 = vsub.s32 1, %v35
  %v37 = vrot.slane %v23, %v36
  %v38 = vlaneseq
  %v39 = vshrl.u32 %v38, 7
  %v40 = vsub.s32 2, %v39
  %v41 = vrot.slane %v23, %v40
  %v42 = vlaneseq
  %v43 = vshrl.u32 %v42, 7
  %v44 = vsub.s32 3, %v43
  %v45 = vrot.slane %v23, %v44
  %v46 = vlaneseq
  %v47 = vshrl.u32 %v46, 7
  %v48 = vsub.s32 4, %v47
  %v49 = vrot.slane %v23, %v48
  %v55 = vmul.f32 %v27, %v33
  %v56 = vmul.f32 %v27, %v37
  %v57 = vmul.f32 %v27, %v41
  %v58 = vmul.f32 %v27, %v45
  %v59 = vmul.f32 %v27, %v49
  %v61 = vlaneseq
  %v62 = vshrl.u32 %v61, 7
  %v63 = vsub.s32 0, %v62
  %v64 = vrot.slane %v22, %v63
  %v65 = vlaneseq
  %v66 = vshrl.u32 %v65, 7
  %v67 = vsub.s32 1, %v66
  %v68 = vrot.slane %v22, %v67
  %v69 = vlaneseq
  %v70 = vshrl.u32 %v69, 7
  %v71 = vsub.s32 2, %v70
  %v72 = vrot.slane %v22, %v71
  %v73 = vlaneseq
  %v74 = vshrl.u32 %v73, 7
  %v75 = vsub.s32 3, %v74
  %v76 = vrot.slane %v22, %v75
  %v77 = vlaneseq
  %v78 = vshrl.u32 %v77, 7
  %v79 = vsub.s32 4, %v78
  %v80 = vrot.slane %v22, %v79
  %v86 = vadd.f32 %v64, %v55
  %v87 = vadd.f32 %v68, %v56
  %v88 = vadd.f32 %v72, %v57
  %v89 = vadd.f32 %v76, %v58
  %v90 = vadd.f32 %v80, %v59
  %s91 = scalar_lea.vmem %s1, 1
  %v92 = vld [vmem:[%s91] ss:$4 sm:$0x1f]
  %93 = vset.pattern.permute.xlu0 1
  %94 = vperm.xlu0 %93, %v21
  %v95 = vpop.permute.xlu0 %94
  %v98 = vlaneseq
  %v99 = vshrl.u32 %v98, 7
  %v100 = vsub.s32 0, %v99
  %v101 = vrot.slane %v92, %v100
  %v102 = vlaneseq
  %v103 = vshrl.u32 %v102, 7
  %v104 = vsub.s32 1, %v103
  %v105 = vrot.slane %v92, %v104
  %v106 = vlaneseq
  %v107 = vshrl.u32 %v106, 7
  %v108 = vsub.s32 2, %v107
  %v109 = vrot.slane %v92, %v108
  %v110 = vlaneseq
  %v111 = vshrl.u32 %v110, 7
  %v112 = vsub.s32 3, %v111
  %v113 = vrot.slane %v92, %v112
  %v114 = vlaneseq
  %v115 = vshrl.u32 %v114, 7
  %v116 = vsub.s32 4, %v115
  %v117 = vrot.slane %v92, %v116
  %v123 = vmul.f32 %v95, %v101
  %v124 = vmul.f32 %v95, %v105
  %v125 = vmul.f32 %v95, %v109
  %v126 = vmul.f32 %v95, %v113
  %v127 = vmul.f32 %v95, %v117
  %v128 = vadd.f32 %v86, %v123
  %v129 = vadd.f32 %v87, %v124
  %v130 = vadd.f32 %v88, %v125
  %v131 = vadd.f32 %v89, %v126
  %v132 = vadd.f32 %v90, %v127
  %s133 = scalar_lea.vmem %s1, 2
  %v134 = vld [vmem:[%s133] ss:$4 sm:$0x1f]
  %135 = vset.pattern.permute.xlu0 2
  %136 = vperm.xlu0 %135, %v21
  %v137 = vpop.permute.xlu0 %136
  %v140 = vlaneseq
  %v141 = vshrl.u32 %v140, 7
  %v142 = vsub.s32 0, %v141
  %v143 = vrot.slane %v134, %v142
  %v144 = vlaneseq
  %v145 = vshrl.u32 %v144, 7
  %v146 = vsub.s32 1, %v145
  %v147 = vrot.slane %v134, %v146
  %v148 = vlaneseq
  %v149 = vshrl.u32 %v148, 7
  %v150 = vsub.s32 2, %v149
  %v151 = vrot.slane %v134, %v150
  %v152 = vlaneseq
  %v153 = vshrl.u32 %v152, 7
  %v154 = vsub.s32 3, %v153
  %v155 = vrot.slane %v134, %v154
  %v156 = vlaneseq
  %v157 = vshrl.u32 %v156, 7
  %v158 = vsub.s32 4, %v157
  %v159 = vrot.slane %v134, %v158
  %v165 = vmul.f32 %v137, %v143
  %v166 = vmul.f32 %v137, %v147
  %v167 = vmul.f32 %v137, %v151
  %v168 = vmul.f32 %v137, %v155
  %v169 = vmul.f32 %v137, %v159
  %v170 = vadd.f32 %v128, %v165
  %v171 = vadd.f32 %v129, %v166
  %v172 = vadd.f32 %v130, %v167
  %v173 = vadd.f32 %v131, %v168
  %v174 = vadd.f32 %v132, %v169
  %v175 = vmax.f32 %v170, 0.0
  %v176 = vmax.f32 %v171, 0.0
  %v177 = vmax.f32 %v172, 0.0
  %v178 = vmax.f32 %v173, 0.0
  %v179 = vmax.f32 %v174, 0.0
  %v180 = vpack.c.bf16 %v175, %v175
  %v181 = vpack.c.bf16 %v176, %v176
  %v182 = vpack.c.bf16 %v177, %v177
  %v183 = vpack.c.bf16 %v178, %v178
  %v184 = vpack.c.bf16 %v179, %v179
  %v185 = vld [vmem:[%s3] sm:$0xf]
  %v186 = vld [vmem:[%s3 + $0x4] sm:$0xf]
  %v187 = vld [vmem:[%s3 + $0x8] sm:$0xf]
  %v188 = vld [vmem:[%s3 + $0xc] sm:$0xf]
  %v189 = vld [vmem:[%s3 + $0x10] sm:$0xf]
  %v190 = vld [vmem:[%s3 + $0x14] sm:$0xf]
  %v191 = vld [vmem:[%s3 + $0x18] sm:$0xf]
  %v192 = vld [vmem:[%s3 + $0x1c] sm:$0xf]
  %v193 = vld [vmem:[%s3 + $0x20] sm:$0xf]
  %v194 = vld [vmem:[%s3 + $0x24] sm:$0xf]
  %v195 = vld [vmem:[%s3 + $0x28] sm:$0xf]
  %v196 = vld [vmem:[%s3 + $0x2c] sm:$0xf]
  %v197 = vld [vmem:[%s3 + $0x30] sm:$0xf]
  %v198 = vld [vmem:[%s3 + $0x34] sm:$0xf]
  %v199 = vld [vmem:[%s3 + $0x38] sm:$0xf]
  %v200 = vld [vmem:[%s3 + $0x3c] sm:$0xf]
  %v201 = vld [vmem:[%s3 + $0x40] sm:$0xf]
  %v202 = vld [vmem:[%s3 + $0x44] sm:$0xf]
  %v203 = vld [vmem:[%s3 + $0x48] sm:$0xf]
  %v204 = vld [vmem:[%s3 + $0x4c] sm:$0xf]
  %v205 = vld [vmem:[%s3 + $0x50] sm:$0xf]
  %v206 = vld [vmem:[%s3 + $0x54] sm:$0xf]
  %v207 = vld [vmem:[%s3 + $0x58] sm:$0xf]
  %v208 = vld [vmem:[%s3 + $0x5c] sm:$0xf]
  %v209 = vld [vmem:[%s3 + $0x60] sm:$0xf]
  %v210 = vld [vmem:[%s3 + $0x64] sm:$0xf]
  %v211 = vld [vmem:[%s3 + $0x68] sm:$0xf]
  %v212 = vld [vmem:[%s3 + $0x6c] sm:$0xf]
  %v213 = vld [vmem:[%s3 + $0x70] sm:$0xf]
  %v214 = vld [vmem:[%s3 + $0x74] sm:$0xf]
  %v215 = vld [vmem:[%s3 + $0x78] sm:$0xf]
  %v216 = vld [vmem:[%s3 + $0x7c] sm:$0xf]
  %v217 = vld [vmem:[%s3 + $0x80] sm:$0xf]
  %v218 = vld [vmem:[%s3 + $0x84] sm:$0xf]
  %v219 = vld [vmem:[%s3 + $0x88] sm:$0xf]
  %v220 = vld [vmem:[%s3 + $0x8c] sm:$0xf]
  %v221 = vld [vmem:[%s3 + $0x90] sm:$0xf]
  %v222 = vld [vmem:[%s3 + $0x94] sm:$0xf]
  %v223 = vld [vmem:[%s3 + $0x98] sm:$0xf]
  %v224 = vld [vmem:[%s3 + $0x9c] sm:$0xf]
  %v225 = vld [vmem:[%s3 + $0xa0] sm:$0xf]
  %v226 = vld [vmem:[%s3 + $0xa4] sm:$0xf]
  %v227 = vld [vmem:[%s3 + $0xa8] sm:$0xf]
  %v228 = vld [vmem:[%s3 + $0xac] sm:$0xf]
  %v229 = vld [vmem:[%s3 + $0xb0] sm:$0xf]
  %v230 = vld [vmem:[%s3 + $0xb4] sm:$0xf]
  %v231 = vld [vmem:[%s3 + $0xb8] sm:$0xf]
  %v232 = vld [vmem:[%s3 + $0xbc] sm:$0xf]
  %v233 = vld [vmem:[%s3 + $0xc0] sm:$0xf]
  %v234 = vld [vmem:[%s3 + $0xc4] sm:$0xf]
  %v235 = vld [vmem:[%s3 + $0xc8] sm:$0xf]
  %v236 = vld [vmem:[%s3 + $0xcc] sm:$0xf]
  %v237 = vld [vmem:[%s3 + $0xd0] sm:$0xf]
  %v238 = vld [vmem:[%s3 + $0xd4] sm:$0xf]
  %v239 = vld [vmem:[%s3 + $0xd8] sm:$0xf]
  %v240 = vld [vmem:[%s3 + $0xdc] sm:$0xf]
  %v241 = vld [vmem:[%s3 + $0xe0] sm:$0xf]
  %v242 = vld [vmem:[%s3 + $0xe4] sm:$0xf]
  %v243 = vld [vmem:[%s3 + $0xe8] sm:$0xf]
  %v244 = vld [vmem:[%s3 + $0xec] sm:$0xf]
  %v245 = vld [vmem:[%s3 + $0xf0] sm:$0xf]
  %v246 = vld [vmem:[%s3 + $0xf4] sm:$0xf]
  %v247 = vld [vmem:[%s3 + $0xf8] sm:$0xf]
  %v248 = vld [vmem:[%s3 + $0xfc] sm:$0xf]
  %v249 = vld [vmem:[%s3 + $0x100] sm:$0xf]
  %v250 = vld [vmem:[%s3 + $0x104] sm:$0xf]
  %v251 = vld [vmem:[%s3 + $0x108] sm:$0xf]
  %v252 = vld [vmem:[%s3 + $0x10c] sm:$0xf]
  %v253 = vld [vmem:[%s3 + $0x110] sm:$0xf]
  %v254 = vld [vmem:[%s3 + $0x114] sm:$0xf]
  %v255 = vld [vmem:[%s3 + $0x118] sm:$0xf]
  %v256 = vld [vmem:[%s3 + $0x11c] sm:$0xf]
  %v257 = vld [vmem:[%s3 + $0x120] sm:$0xf]
  %v258 = vld [vmem:[%s3 + $0x124] sm:$0xf]
  %v259 = vld [vmem:[%s3 + $0x128] sm:$0xf]
  %v260 = vld [vmem:[%s3 + $0x12c] sm:$0xf]
  %v261 = vld [vmem:[%s3 + $0x130] sm:$0xf]
  %v262 = vld [vmem:[%s3 + $0x134] sm:$0xf]
  %v263 = vld [vmem:[%s3 + $0x138] sm:$0xf]
  %v264 = vld [vmem:[%s3 + $0x13c] sm:$0xf]
  %v265 = vld [vmem:[%s2 + $0x5] sm:$0x1f]
  %s266 = scalar_lea.vmem %s1, 20
  %v267 = vld [vmem:[%s266] ss:$4 sm:$0x1f]
  %v269 = vlaneseq
  %v270 = vshrl.u32 %v269, 7
  %v271 = vsub.s32 0, %v270
  %v272 = vrot.slane %v267, %v271
  %v273 = vlaneseq
  %v274 = vshrl.u32 %v273, 7
  %v275 = vsub.s32 1, %v274
  %v276 = vrot.slane %v267, %v275
  %v277 = vlaneseq
  %v278 = vshrl.u32 %v277, 7
  %v279 = vsub.s32 2, %v278
  %v280 = vrot.slane %v267, %v279
  %v281 = vlaneseq
  %v282 = vshrl.u32 %v281, 7
  %v283 = vsub.s32 3, %v282
  %v284 = vrot.slane %v267, %v283
  %v285 = vlaneseq
  %v286 = vshrl.u32 %v285, 7
  %v287 = vsub.s32 4, %v286
  %v288 = vrot.slane %v267, %v287
  %v294 = vmul.f32 %v27, %v272
  %v295 = vmul.f32 %v27, %v276
  %v296 = vmul.f32 %v27, %v280
  %v297 = vmul.f32 %v27, %v284
  %v298 = vmul.f32 %v27, %v288
  %v300 = vlaneseq
  %v301 = vshrl.u32 %v300, 7
  %v302 = vsub.s32 0, %v301
  %v303 = vrot.slane %v265, %v302
  %v304 = vlaneseq
  %v305 = vshrl.u32 %v304, 7
  %v306 = vsub.s32 1, %v305
  %v307 = vrot.slane %v265, %v306
  %v308 = vlaneseq
  %v309 = vshrl.u32 %v308, 7
  %v310 = vsub.s32 2, %v309
  %v311 = vrot.slane %v265, %v310
  %v312 = vlaneseq
  %v313 = vshrl.u32 %v312, 7
  %v314 = vsub.s32 3, %v313
  %v315 = vrot.slane %v265, %v314
  %v316 = vlaneseq
  %v317 = vshrl.u32 %v316, 7
  %v318 = vsub.s32 4, %v317
  %v319 = vrot.slane %v265, %v318
  %v325 = vadd.f32 %v303, %v294
  %v326 = vadd.f32 %v307, %v295
  %v327 = vadd.f32 %v311, %v296
  %v328 = vadd.f32 %v315, %v297
  %v329 = vadd.f32 %v319, %v298
  %s330 = scalar_lea.vmem %s1, 21
  %v331 = vld [vmem:[%s330] ss:$4 sm:$0x1f]
  %v333 = vlaneseq
  %v334 = vshrl.u32 %v333, 7
  %v335 = vsub.s32 0, %v334
  %v336 = vrot.slane %v331, %v335
  %v337 = vlaneseq
  %v338 = vshrl.u32 %v337, 7
  %v339 = vsub.s32 1, %v338
  %v340 = vrot.slane %v331, %v339
  %v341 = vlaneseq
  %v342 = vshrl.u32 %v341, 7
  %v343 = vsub.s32 2, %v342
  %v344 = vrot.slane %v331, %v343
  %v345 = vlaneseq
  %v346 = vshrl.u32 %v345, 7
  %v347 = vsub.s32 3, %v346
  %v348 = vrot.slane %v331, %v347
  %v349 = vlaneseq
  %v350 = vshrl.u32 %v349, 7
  %v351 = vsub.s32 4, %v350
  %v352 = vrot.slane %v331, %v351
  %v358 = vmul.f32 %v95, %v336
  %v359 = vmul.f32 %v95, %v340
  %v360 = vmul.f32 %v95, %v344
  %v361 = vmul.f32 %v95, %v348
  %v362 = vmul.f32 %v95, %v352
  %v363 = vadd.f32 %v325, %v358
  %v364 = vadd.f32 %v326, %v359
  %v365 = vadd.f32 %v327, %v360
  %v366 = vadd.f32 %v328, %v361
  %v367 = vadd.f32 %v329, %v362
  %s368 = scalar_lea.vmem %s1, 22
  %v369 = vld [vmem:[%s368] ss:$4 sm:$0x1f]
  %v371 = vlaneseq
  %v372 = vshrl.u32 %v371, 7
  %v373 = vsub.s32 0, %v372
  %v374 = vrot.slane %v369, %v373
  %v375 = vlaneseq
  %v376 = vshrl.u32 %v375, 7
  %v377 = vsub.s32 1, %v376
  %v378 = vrot.slane %v369, %v377
  %v379 = vlaneseq
  %v380 = vshrl.u32 %v379, 7
  %v381 = vsub.s32 2, %v380
  %v382 = vrot.slane %v369, %v381
  %v383 = vlaneseq
  %v384 = vshrl.u32 %v383, 7
  %v385 = vsub.s32 3, %v384
  %v386 = vrot.slane %v369, %v385
  %v387 = vlaneseq
  %v388 = vshrl.u32 %v387, 7
  %v389 = vsub.s32 4, %v388
  %v390 = vrot.slane %v369, %v389
  %v396 = vmul.f32 %v137, %v374
  %v397 = vmul.f32 %v137, %v378
  %v398 = vmul.f32 %v137, %v382
  %v399 = vmul.f32 %v137, %v386
  %v400 = vmul.f32 %v137, %v390
  %v401 = vadd.f32 %v363, %v396
  %v402 = vadd.f32 %v364, %v397
  %v403 = vadd.f32 %v365, %v398
  %v404 = vadd.f32 %v366, %v399
  %v405 = vadd.f32 %v367, %v400
  %v406 = vmax.f32 %v401, 0.0
  %v407 = vmax.f32 %v402, 0.0
  %v408 = vmax.f32 %v403, 0.0
  %v409 = vmax.f32 %v404, 0.0
  %v410 = vmax.f32 %v405, 0.0
  %v411 = vpack.c.bf16 %v406, %v406
  %v412 = vpack.c.bf16 %v407, %v407
  %v413 = vpack.c.bf16 %v408, %v408
  %v414 = vpack.c.bf16 %v409, %v409
  %v415 = vpack.c.bf16 %v410, %v410
  %v416 = vld [vmem:[%s3 + $0x140] sm:$0xf]
  %v417 = vld [vmem:[%s3 + $0x144] sm:$0xf]
  %v418 = vld [vmem:[%s3 + $0x148] sm:$0xf]
  %v419 = vld [vmem:[%s3 + $0x14c] sm:$0xf]
  %v420 = vld [vmem:[%s3 + $0x150] sm:$0xf]
  %v421 = vld [vmem:[%s3 + $0x154] sm:$0xf]
  %v422 = vld [vmem:[%s3 + $0x158] sm:$0xf]
  %v423 = vld [vmem:[%s3 + $0x15c] sm:$0xf]
  %v424 = vld [vmem:[%s3 + $0x160] sm:$0xf]
  %v425 = vld [vmem:[%s3 + $0x164] sm:$0xf]
  %v426 = vld [vmem:[%s3 + $0x168] sm:$0xf]
  %v427 = vld [vmem:[%s3 + $0x16c] sm:$0xf]
  %v428 = vld [vmem:[%s3 + $0x170] sm:$0xf]
  %v429 = vld [vmem:[%s3 + $0x174] sm:$0xf]
  %v430 = vld [vmem:[%s3 + $0x178] sm:$0xf]
  %v431 = vld [vmem:[%s3 + $0x17c] sm:$0xf]
  %v432 = vld [vmem:[%s3 + $0x180] sm:$0xf]
  %v433 = vld [vmem:[%s3 + $0x184] sm:$0xf]
  %v434 = vld [vmem:[%s3 + $0x188] sm:$0xf]
  %v435 = vld [vmem:[%s3 + $0x18c] sm:$0xf]
  %v436 = vld [vmem:[%s3 + $0x190] sm:$0xf]
  %v437 = vld [vmem:[%s3 + $0x194] sm:$0xf]
  %v438 = vld [vmem:[%s3 + $0x198] sm:$0xf]
  %v439 = vld [vmem:[%s3 + $0x19c] sm:$0xf]
  %v440 = vld [vmem:[%s3 + $0x1a0] sm:$0xf]
  %v441 = vld [vmem:[%s3 + $0x1a4] sm:$0xf]
  %v442 = vld [vmem:[%s3 + $0x1a8] sm:$0xf]
  %v443 = vld [vmem:[%s3 + $0x1ac] sm:$0xf]
  %v444 = vld [vmem:[%s3 + $0x1b0] sm:$0xf]
  %v445 = vld [vmem:[%s3 + $0x1b4] sm:$0xf]
  %v446 = vld [vmem:[%s3 + $0x1b8] sm:$0xf]
  %v447 = vld [vmem:[%s3 + $0x1bc] sm:$0xf]
  %v448 = vld [vmem:[%s3 + $0x1c0] sm:$0xf]
  %v449 = vld [vmem:[%s3 + $0x1c4] sm:$0xf]
  %v450 = vld [vmem:[%s3 + $0x1c8] sm:$0xf]
  %v451 = vld [vmem:[%s3 + $0x1cc] sm:$0xf]
  %v452 = vld [vmem:[%s3 + $0x1d0] sm:$0xf]
  %v453 = vld [vmem:[%s3 + $0x1d4] sm:$0xf]
  %v454 = vld [vmem:[%s3 + $0x1d8] sm:$0xf]
  %v455 = vld [vmem:[%s3 + $0x1dc] sm:$0xf]
  %v456 = vld [vmem:[%s3 + $0x1e0] sm:$0xf]
  %v457 = vld [vmem:[%s3 + $0x1e4] sm:$0xf]
  %v458 = vld [vmem:[%s3 + $0x1e8] sm:$0xf]
  %v459 = vld [vmem:[%s3 + $0x1ec] sm:$0xf]
  %v460 = vld [vmem:[%s3 + $0x1f0] sm:$0xf]
  %v461 = vld [vmem:[%s3 + $0x1f4] sm:$0xf]
  %v462 = vld [vmem:[%s3 + $0x1f8] sm:$0xf]
  %v463 = vld [vmem:[%s3 + $0x1fc] sm:$0xf]
  %v464 = vld [vmem:[%s3 + $0x200] sm:$0xf]
  %v465 = vld [vmem:[%s3 + $0x204] sm:$0xf]
  %v466 = vld [vmem:[%s3 + $0x208] sm:$0xf]
  %v467 = vld [vmem:[%s3 + $0x20c] sm:$0xf]
  %v468 = vld [vmem:[%s3 + $0x210] sm:$0xf]
  %v469 = vld [vmem:[%s3 + $0x214] sm:$0xf]
  %v470 = vld [vmem:[%s3 + $0x218] sm:$0xf]
  %v471 = vld [vmem:[%s3 + $0x21c] sm:$0xf]
  %v472 = vld [vmem:[%s3 + $0x220] sm:$0xf]
  %v473 = vld [vmem:[%s3 + $0x224] sm:$0xf]
  %v474 = vld [vmem:[%s3 + $0x228] sm:$0xf]
  %v475 = vld [vmem:[%s3 + $0x22c] sm:$0xf]
  %v476 = vld [vmem:[%s3 + $0x230] sm:$0xf]
  %v477 = vld [vmem:[%s3 + $0x234] sm:$0xf]
  %v478 = vld [vmem:[%s3 + $0x238] sm:$0xf]
  %v479 = vld [vmem:[%s3 + $0x23c] sm:$0xf]
  %v480 = vld [vmem:[%s3 + $0x240] sm:$0xf]
  %v481 = vld [vmem:[%s3 + $0x244] sm:$0xf]
  %v482 = vld [vmem:[%s3 + $0x248] sm:$0xf]
  %v483 = vld [vmem:[%s3 + $0x24c] sm:$0xf]
  %v484 = vld [vmem:[%s3 + $0x250] sm:$0xf]
  %v485 = vld [vmem:[%s3 + $0x254] sm:$0xf]
  %v486 = vld [vmem:[%s3 + $0x258] sm:$0xf]
  %v487 = vld [vmem:[%s3 + $0x25c] sm:$0xf]
  %v488 = vld [vmem:[%s3 + $0x260] sm:$0xf]
  %v489 = vld [vmem:[%s3 + $0x264] sm:$0xf]
  %v490 = vld [vmem:[%s3 + $0x268] sm:$0xf]
  %v491 = vld [vmem:[%s3 + $0x26c] sm:$0xf]
  %v492 = vld [vmem:[%s3 + $0x270] sm:$0xf]
  %v493 = vld [vmem:[%s3 + $0x274] sm:$0xf]
  %v494 = vld [vmem:[%s3 + $0x278] sm:$0xf]
  %v495 = vld [vmem:[%s3 + $0x27c] sm:$0xf]
  %v576 = vunpack.c.l.b16 %v416
  %v577 = vunpack.c.l.b16 %v417
  %v578 = vunpack.c.l.b16 %v418
  %v579 = vunpack.c.l.b16 %v419
  %v580 = vunpack.c.l.b16 %v420
  %v581 = vunpack.c.l.b16 %v421
  %v582 = vunpack.c.l.b16 %v422
  %v583 = vunpack.c.l.b16 %v423
  %v584 = vunpack.c.l.b16 %v424
  %v585 = vunpack.c.l.b16 %v425
  %v586 = vunpack.c.l.b16 %v426
  %v587 = vunpack.c.l.b16 %v427
  %v588 = vunpack.c.l.b16 %v428
  %v589 = vunpack.c.l.b16 %v429
  %v590 = vunpack.c.l.b16 %v430
  %v591 = vunpack.c.l.b16 %v431
  %v592 = vunpack.c.l.b16 %v432
  %v593 = vunpack.c.l.b16 %v433
  %v594 = vunpack.c.l.b16 %v434
  %v595 = vunpack.c.l.b16 %v435
  %v596 = vunpack.c.l.b16 %v436
  %v597 = vunpack.c.l.b16 %v437
  %v598 = vunpack.c.l.b16 %v438
  %v599 = vunpack.c.l.b16 %v439
  %v600 = vunpack.c.l.b16 %v440
  %v601 = vunpack.c.l.b16 %v441
  %v602 = vunpack.c.l.b16 %v442
  %v603 = vunpack.c.l.b16 %v443
  %v604 = vunpack.c.l.b16 %v444
  %v605 = vunpack.c.l.b16 %v445
  %v606 = vunpack.c.l.b16 %v446
  %v607 = vunpack.c.l.b16 %v447
  %v608 = vunpack.c.l.b16 %v448
  %v609 = vunpack.c.l.b16 %v449
  %v610 = vunpack.c.l.b16 %v450
  %v611 = vunpack.c.l.b16 %v451
  %v612 = vunpack.c.l.b16 %v452
  %v613 = vunpack.c.l.b16 %v453
  %v614 = vunpack.c.l.b16 %v454
  %v615 = vunpack.c.l.b16 %v455
  %v616 = vunpack.c.l.b16 %v456
  %v617 = vunpack.c.l.b16 %v457
  %v618 = vunpack.c.l.b16 %v458
  %v619 = vunpack.c.l.b16 %v459
  %v620 = vunpack.c.l.b16 %v460
  %v621 = vunpack.c.l.b16 %v461
  %v622 = vunpack.c.l.b16 %v462
  %v623 = vunpack.c.l.b16 %v463
  %v624 = vunpack.c.l.b16 %v464
  %v625 = vunpack.c.l.b16 %v465
  %v626 = vunpack.c.l.b16 %v466
  %v627 = vunpack.c.l.b16 %v467
  %v628 = vunpack.c.l.b16 %v468
  %v629 = vunpack.c.l.b16 %v469
  %v630 = vunpack.c.l.b16 %v470
  %v631 = vunpack.c.l.b16 %v471
  %v632 = vunpack.c.l.b16 %v472
  %v633 = vunpack.c.l.b16 %v473
  %v634 = vunpack.c.l.b16 %v474
  %v635 = vunpack.c.l.b16 %v475
  %v636 = vunpack.c.l.b16 %v476
  %v637 = vunpack.c.l.b16 %v477
  %v638 = vunpack.c.l.b16 %v478
  %v639 = vunpack.c.l.b16 %v479
  %v640 = vunpack.c.l.b16 %v480
  %v641 = vunpack.c.l.b16 %v481
  %v642 = vunpack.c.l.b16 %v482
  %v643 = vunpack.c.l.b16 %v483
  %v644 = vunpack.c.l.b16 %v484
  %v645 = vunpack.c.l.b16 %v485
  %v646 = vunpack.c.l.b16 %v486
  %v647 = vunpack.c.l.b16 %v487
  %v648 = vunpack.c.l.b16 %v488
  %v649 = vunpack.c.l.b16 %v489
  %v650 = vunpack.c.l.b16 %v490
  %v651 = vunpack.c.l.b16 %v491
  %v652 = vunpack.c.l.b16 %v492
  %v653 = vunpack.c.l.b16 %v493
  %v654 = vunpack.c.l.b16 %v494
  %v655 = vunpack.c.l.b16 %v495
  %v656 = vpack.c.b16 %v577, %v576
  %v657 = vpack.c.b16 %v579, %v578
  %v658 = vpack.c.b16 %v581, %v580
  %v659 = vpack.c.b16 %v583, %v582
  %v660 = vpack.c.b16 %v585, %v584
  %v661 = vpack.c.b16 %v587, %v586
  %v662 = vpack.c.b16 %v589, %v588
  %v663 = vpack.c.b16 %v591, %v590
  %v664 = vpack.c.b16 %v593, %v592
  %v665 = vpack.c.b16 %v595, %v594
  %v666 = vpack.c.b16 %v597, %v596
  %v667 = vpack.c.b16 %v599, %v598
  %v668 = vpack.c.b16 %v601, %v600
  %v669 = vpack.c.b16 %v603, %v602
  %v670 = vpack.c.b16 %v605, %v604
  %v671 = vpack.c.b16 %v607, %v606
  %v672 = vpack.c.b16 %v609, %v608
  %v673 = vpack.c.b16 %v611, %v610
  %v674 = vpack.c.b16 %v613, %v612
  %v675 = vpack.c.b16 %v615, %v614
  %v676 = vpack.c.b16 %v617, %v616
  %v677 = vpack.c.b16 %v619, %v618
  %v678 = vpack.c.b16 %v621, %v620
  %v679 = vpack.c.b16 %v623, %v622
  %v680 = vpack.c.b16 %v625, %v624
  %v681 = vpack.c.b16 %v627, %v626
  %v682 = vpack.c.b16 %v629, %v628
  %v683 = vpack.c.b16 %v631, %v630
  %v684 = vpack.c.b16 %v633, %v632
  %v685 = vpack.c.b16 %v635, %v634
  %v686 = vpack.c.b16 %v637, %v636
  %v687 = vpack.c.b16 %v639, %v638
  %v688 = vpack.c.b16 %v641, %v640
  %v689 = vpack.c.b16 %v643, %v642
  %v690 = vpack.c.b16 %v645, %v644
  %v691 = vpack.c.b16 %v647, %v646
  %v692 = vpack.c.b16 %v649, %v648
  %v693 = vpack.c.b16 %v651, %v650
  %v694 = vpack.c.b16 %v653, %v652
  %v695 = vpack.c.b16 %v655, %v654
  %736 = vmatprep.subr.bf16.mxu0 0
  %737 = vmatpush1.bf16.msra.mxu0 %v656
  %738 = vmatprep.subr.bf16.mxu0 0
  %739 = vmatpush1.bf16.msra.mxu0 %v657
  %740 = vmatprep.subr.bf16.mxu0 0
  %741 = vmatpush1.bf16.msra.mxu0 %v658
  %742 = vmatprep.subr.bf16.mxu0 0
  %743 = vmatpush1.bf16.msra.mxu0 %v659
  %744 = vmatprep.subr.bf16.mxu0 0
  %745 = vmatpush1.bf16.msra.mxu0 %v660
  %746 = vmatprep.subr.bf16.mxu0 0
  %747 = vmatpush1.bf16.msra.mxu0 %v661
  %748 = vmatprep.subr.bf16.mxu0 0
  %749 = vmatpush1.bf16.msra.mxu0 %v662
  %750 = vmatprep.subr.bf16.mxu0 0
  %751 = vmatpush1.bf16.msra.mxu0 %v663
  %752 = vmatprep.subr.bf16.mxu0 0
  %753 = vmatpush1.bf16.msra.mxu0 %v664
  %754 = vmatprep.subr.bf16.mxu0 0
  %755 = vmatpush1.bf16.msra.mxu0 %v665
  %756 = vmatprep.subr.bf16.mxu0 0
  %757 = vmatpush1.bf16.msra.mxu0 %v666
  %758 = vmatprep.subr.bf16.mxu0 0
  %759 = vmatpush1.bf16.msra.mxu0 %v667
  %760 = vmatprep.subr.bf16.mxu0 0
  %761 = vmatpush1.bf16.msra.mxu0 %v668
  %762 = vmatprep.subr.bf16.mxu0 0
  %763 = vmatpush1.bf16.msra.mxu0 %v669
  %764 = vmatprep.subr.bf16.mxu0 0
  %765 = vmatpush1.bf16.msra.mxu0 %v670
  %766 = vmatprep.subr.bf16.mxu0 0
  %767 = vmatpush1.bf16.msra.mxu0 %v671
  %768 = vmatprep.mubr.bf16.mxu0 %v412
  %769 = vmatmul.mubr.bf16.gmra.mrb[0].mxu0 %v411
  %v770 = vpop.f32.mrb[0].mxu0
  %v771 = vadd.f32 0.0, %v770
  %v772 = vpop.f32.mrb[0].mxu0
  %v773 = vpop.f32.mrb[0].mxu0
  %v774 = vpop.f32.mrb[0].mxu0
  %775 = vdwg.mxu0
  %776 = vmatprep.subr.bf16.mxu0 0
  %777 = vmatpush1.bf16.msra.mxu0 %v672
  %778 = vmatprep.subr.bf16.mxu0 0
  %779 = vmatpush1.bf16.msra.mxu0 %v673
  %780 = vmatprep.subr.bf16.mxu0 0
  %781 = vmatpush1.bf16.msra.mxu0 %v674
  %782 = vmatprep.subr.bf16.mxu0 0
  %783 = vmatpush1.bf16.msra.mxu0 %v675
  %784 = vmatprep.subr.bf16.mxu0 0
  %785 = vmatpush1.bf16.msra.mxu0 %v676
  %786 = vmatprep.subr.bf16.mxu0 0
  %787 = vmatpush1.bf16.msra.mxu0 %v677
  %788 = vmatprep.subr.bf16.mxu0 0
  %789 = vmatpush1.bf16.msra.mxu0 %v678
  %790 = vmatprep.subr.bf16.mxu0 0
  %791 = vmatpush1.bf16.msra.mxu0 %v679
  %792 = vmatprep.subr.bf16.mxu0 0
  %793 = vmatpush1.bf16.msra.mxu0 %v680
  %794 = vmatprep.subr.bf16.mxu0 0
  %795 = vmatpush1.bf16.msra.mxu0 %v681
  %796 = vmatprep.subr.bf16.mxu0 0
  %797 = vmatpush1.bf16.msra.mxu0 %v682
  %798 = vmatprep.subr.bf16.mxu0 0
  %799 = vmatpush1.bf16.msra.mxu0 %v683
  %800 = vmatprep.subr.bf16.mxu0 0
  %801 = vmatpush1.bf16.msra.mxu0 %v684
  %802 = vmatprep.subr.bf16.mxu0 0
  %803 = vmatpush1.bf16.msra.mxu0 %v685
  %804 = vmatprep.subr.bf16.mxu0 0
  %805 = vmatpush1.bf16.msra.mxu0 %v686
  %806 = vmatprep.subr.bf16.mxu0 0
  %807 = vmatpush1.bf16.msra.mxu0 %v687
  %808 = vmatprep.mubr.bf16.mxu0 %v414
  %809 = vmatmul.mubr.bf16.gmra.mrb[0].mxu0 %v413
  %v810 = vpop.f32.mrb[0].mxu0
  %v811 = vadd.f32 %v771, %v810
  %v812 = vpop.f32.mrb[0].mxu0
  %v813 = vpop.f32.mrb[0].mxu0
  %v814 = vpop.f32.mrb[0].mxu0
  %815 = vdwg.mxu0
  %816 = vmatprep.subr.bf16.mxu0 0
  %817 = vmatpush1.bf16.msra.mxu0 %v688
  %818 = vmatprep.subr.bf16.mxu0 0
  %819 = vmatpush1.bf16.msra.mxu0 %v689
  %820 = vmatprep.subr.bf16.mxu0 0
  %821 = vmatpush1.bf16.msra.mxu0 %v690
  %822 = vmatprep.subr.bf16.mxu0 0
  %823 = vmatpush1.bf16.msra.mxu0 %v691
  %824 = vmatprep.subr.bf16.mxu0 0
  %825 = vmatpush1.bf16.msra.mxu0 %v692
  %826 = vmatprep.subr.bf16.mxu0 0
  %827 = vmatpush1.bf16.msra.mxu0 %v693
  %828 = vmatprep.subr.bf16.mxu0 0
  %829 = vmatpush1.bf16.msra.mxu0 %v694
  %830 = vmatprep.subr.bf16.mxu0 0
  %831 = vmatpush1.bf16.msra.mxu0 %v695
  %832 = vmatprep.subr.bf16.mxu0 0
  %833 = vmatpush1.bf16.msra.mxu0 0
  %834 = vmatprep.subr.bf16.mxu0 0
  %835 = vmatpush1.bf16.msra.mxu0 0
  %836 = vmatprep.subr.bf16.mxu0 0
  %837 = vmatpush1.bf16.msra.mxu0 0
  %838 = vmatprep.subr.bf16.mxu0 0
  %839 = vmatpush1.bf16.msra.mxu0 0
  %840 = vmatprep.subr.bf16.mxu0 0
  %841 = vmatpush1.bf16.msra.mxu0 0
  %842 = vmatprep.subr.bf16.mxu0 0
  %843 = vmatpush1.bf16.msra.mxu0 0
  %844 = vmatprep.subr.bf16.mxu0 0
  %845 = vmatpush1.bf16.msra.mxu0 0
  %846 = vmatprep.subr.bf16.mxu0 0
  %847 = vmatpush1.bf16.msra.mxu0 0
  %848 = vmatprep.mubr.bf16.mxu0 0
  %849 = vmatmul.mubr.bf16.gmra.mrb[0].mxu0 %v415
  %v850 = vpop.f32.mrb[0].mxu0
  %v851 = vadd.f32 %v811, %v850
  %v852 = vpop.f32.mrb[0].mxu0
  %v853 = vpop.f32.mrb[0].mxu0
  %v854 = vpop.f32.mrb[0].mxu0
  %855 = vdwg.mxu0
  %v936 = vunpack.c.l.b16 %v185
  %v937 = vunpack.c.l.b16 %v186
  %v938 = vunpack.c.l.b16 %v187
  %v939 = vunpack.c.l.b16 %v188
  %v940 = vunpack.c.l.b16 %v189
  %v941 = vunpack.c.l.b16 %v190
  %v942 = vunpack.c.l.b16 %v191
  %v943 = vunpack.c.l.b16 %v192
  %v944 = vunpack.c.l.b16 %v193
  %v945 = vunpack.c.l.b16 %v194
  %v946 = vunpack.c.l.b16 %v195
  %v947 = vunpack.c.l.b16 %v196
  %v948 = vunpack.c.l.b16 %v197
  %v949 = vunpack.c.l.b16 %v198
  %v950 = vunpack.c.l.b16 %v199
  %v951 = vunpack.c.l.b16 %v200
  %v952 = vunpack.c.l.b16 %v201
  %v953 = vunpack.c.l.b16 %v202
  %v954 = vunpack.c.l.b16 %v203
  %v955 = vunpack.c.l.b16 %v204
  %v956 = vunpack.c.l.b16 %v205
  %v957 = vunpack.c.l.b16 %v206
  %v958 = vunpack.c.l.b16 %v207
  %v959 = vunpack.c.l.b16 %v208
  %v960 = vunpack.c.l.b16 %v209
  %v961 = vunpack.c.l.b16 %v210
  %v962 = vunpack.c.l.b16 %v211
  %v963 = vunpack.c.l.b16 %v212
  %v964 = vunpack.c.l.b16 %v213
  %v965 = vunpack.c.l.b16 %v214
  %v966 = vunpack.c.l.b16 %v215
  %v967 = vunpack.c.l.b16 %v216
  %v968 = vunpack.c.l.b16 %v217
  %v969 = vunpack.c.l.b16 %v218
  %v970 = vunpack.c.l.b16 %v219
  %v971 = vunpack.c.l.b16 %v220
  %v972 = vunpack.c.l.b16 %v221
  %v973 = vunpack.c.l.b16 %v222
  %v974 = vunpack.c.l.b16 %v223
  %v975 = vunpack.c.l.b16 %v224
  %v976 = vunpack.c.l.b16 %v225
  %v977 = vunpack.c.l.b16 %v226
  %v978 = vunpack.c.l.b16 %v227
  %v979 = vunpack.c.l.b16 %v228
  %v980 = vunpack.c.l.b16 %v229
  %v981 = vunpack.c.l.b16 %v230
  %v982 = vunpack.c.l.b16 %v231
  %v983 = vunpack.c.l.b16 %v232
  %v984 = vunpack.c.l.b16 %v233
  %v985 = vunpack.c.l.b16 %v234
  %v986 = vunpack.c.l.b16 %v235
  %v987 = vunpack.c.l.b16 %v236
  %v988 = vunpack.c.l.b16 %v237
  %v989 = vunpack.c.l.b16 %v238
  %v990 = vunpack.c.l.b16 %v239
  %v991 = vunpack.c.l.b16 %v240
  %v992 = vunpack.c.l.b16 %v241
  %v993 = vunpack.c.l.b16 %v242
  %v994 = vunpack.c.l.b16 %v243
  %v995 = vunpack.c.l.b16 %v244
  %v996 = vunpack.c.l.b16 %v245
  %v997 = vunpack.c.l.b16 %v246
  %v998 = vunpack.c.l.b16 %v247
  %v999 = vunpack.c.l.b16 %v248
  %v1000 = vunpack.c.l.b16 %v249
  %v1001 = vunpack.c.l.b16 %v250
  %v1002 = vunpack.c.l.b16 %v251
  %v1003 = vunpack.c.l.b16 %v252
  %v1004 = vunpack.c.l.b16 %v253
  %v1005 = vunpack.c.l.b16 %v254
  %v1006 = vunpack.c.l.b16 %v255
  %v1007 = vunpack.c.l.b16 %v256
  %v1008 = vunpack.c.l.b16 %v257
  %v1009 = vunpack.c.l.b16 %v258
  %v1010 = vunpack.c.l.b16 %v259
  %v1011 = vunpack.c.l.b16 %v260
  %v1012 = vunpack.c.l.b16 %v261
  %v1013 = vunpack.c.l.b16 %v262
  %v1014 = vunpack.c.l.b16 %v263
  %v1015 = vunpack.c.l.b16 %v264
  %v1016 = vpack.c.b16 %v937, %v936
  %v1017 = vpack.c.b16 %v939, %v938
  %v1018 = vpack.c.b16 %v941, %v940
  %v1019 = vpack.c.b16 %v943, %v942
  %v1020 = vpack.c.b16 %v945, %v944
  %v1021 = vpack.c.b16 %v947, %v946
  %v1022 = vpack.c.b16 %v949, %v948
  %v1023 = vpack.c.b16 %v951, %v950
  %v1024 = vpack.c.b16 %v953, %v952
  %v1025 = vpack.c.b16 %v955, %v954
  %v1026 = vpack.c.b16 %v957, %v956
  %v1027 = vpack.c.b16 %v959, %v958
  %v1028 = vpack.c.b16 %v961, %v960
  %v1029 = vpack.c.b16 %v963, %v962
  %v1030 = vpack.c.b16 %v965, %v964
  %v1031 = vpack.c.b16 %v967, %v966
  %v1032 = vpack.c.b16 %v969, %v968
  %v1033 = vpack.c.b16 %v971, %v970
  %v1034 = vpack.c.b16 %v973, %v972
  %v1035 = vpack.c.b16 %v975, %v974
  %v1036 = vpack.c.b16 %v977, %v976
  %v1037 = vpack.c.b16 %v979, %v978
  %v1038 = vpack.c.b16 %v981, %v980
  %v1039 = vpack.c.b16 %v983, %v982
  %v1040 = vpack.c.b16 %v985, %v984
  %v1041 = vpack.c.b16 %v987, %v986
  %v1042 = vpack.c.b16 %v989, %v988
  %v1043 = vpack.c.b16 %v991, %v990
  %v1044 = vpack.c.b16 %v993, %v992
  %v1045 = vpack.c.b16 %v995, %v994
  %v1046 = vpack.c.b16 %v997, %v996
  %v1047 = vpack.c.b16 %v999, %v998
  %v1048 = vpack.c.b16 %v1001, %v1000
  %v1049 = vpack.c.b16 %v1003, %v1002
  %v1050 = vpack.c.b16 %v1005, %v1004
  %v1051 = vpack.c.b16 %v1007, %v1006
  %v1052 = vpack.c.b16 %v1009, %v1008
  %v1053 = vpack.c.b16 %v1011, %v1010
  %v1054 = vpack.c.b16 %v1013, %v1012
  %v1055 = vpack.c.b16 %v1015, %v1014
  %1096 = vmatprep.subr.bf16.mxu0 0
  %1097 = vmatpush1.bf16.msra.mxu0 %v1016
  %1098 = vmatprep.subr.bf16.mxu0 0
  %1099 = vmatpush1.bf16.msra.mxu0 %v1017
  %1100 = vmatprep.subr.bf16.mxu0 0
  %1101 = vmatpush1.bf16.msra.mxu0 %v1018
  %1102 = vmatprep.subr.bf16.mxu0 0
  %1103 = vmatpush1.bf16.msra.mxu0 %v1019
  %1104 = vmatprep.subr.bf16.mxu0 0
  %1105 = vmatpush1.bf16.msra.mxu0 %v1020
  %1106 = vmatprep.subr.bf16.mxu0 0
  %1107 = vmatpush1.bf16.msra.mxu0 %v1021
  %1108 = vmatprep.subr.bf16.mxu0 0
  %1109 = vmatpush1.bf16.msra.mxu0 %v1022
  %1110 = vmatprep.subr.bf16.mxu0 0
  %1111 = vmatpush1.bf16.msra.mxu0 %v1023
  %1112 = vmatprep.subr.bf16.mxu0 0
  %1113 = vmatpush1.bf16.msra.mxu0 %v1024
  %1114 = vmatprep.subr.bf16.mxu0 0
  %1115 = vmatpush1.bf16.msra.mxu0 %v1025
  %1116 = vmatprep.subr.bf16.mxu0 0
  %1117 = vmatpush1.bf16.msra.mxu0 %v1026
  %1118 = vmatprep.subr.bf16.mxu0 0
  %1119 = vmatpush1.bf16.msra.mxu0 %v1027
  %1120 = vmatprep.subr.bf16.mxu0 0
  %1121 = vmatpush1.bf16.msra.mxu0 %v1028
  %1122 = vmatprep.subr.bf16.mxu0 0
  %1123 = vmatpush1.bf16.msra.mxu0 %v1029
  %1124 = vmatprep.subr.bf16.mxu0 0
  %1125 = vmatpush1.bf16.msra.mxu0 %v1030
  %1126 = vmatprep.subr.bf16.mxu0 0
  %1127 = vmatpush1.bf16.msra.mxu0 %v1031
  %1128 = vmatprep.mubr.bf16.mxu0 %v181
  %1129 = vmatmul.mubr.bf16.gmra.mrb[0].mxu0 %v180
  %v1130 = vpop.f32.mrb[0].mxu0
  %v1131 = vadd.f32 %v851, %v1130
  %v1132 = vpop.f32.mrb[0].mxu0
  %v1133 = vpop.f32.mrb[0].mxu0
  %v1134 = vpop.f32.mrb[0].mxu0
  %1135 = vdwg.mxu0
  %1136 = vmatprep.subr.bf16.mxu0 0
  %1137 = vmatpush1.bf16.msra.mxu0 %v1032
  %1138 = vmatprep.subr.bf16.mxu0 0
  %1139 = vmatpush1.bf16.msra.mxu0 %v1033
  %1140 = vmatprep.subr.bf16.mxu0 0
  %1141 = vmatpush1.bf16.msra.mxu0 %v1034
  %1142 = vmatprep.subr.bf16.mxu0 0
  %1143 = vmatpush1.bf16.msra.mxu0 %v1035
  %1144 = vmatprep.subr.bf16.mxu0 0
  %1145 = vmatpush1.bf16.msra.mxu0 %v1036
  %1146 = vmatprep.subr.bf16.mxu0 0
  %1147 = vmatpush1.bf16.msra.mxu0 %v1037
  %1148 = vmatprep.subr.bf16.mxu0 0
  %1149 = vmatpush1.bf16.msra.mxu0 %v1038
  %1150 = vmatprep.subr.bf16.mxu0 0
  %1151 = vmatpush1.bf16.msra.mxu0 %v1039
  %1152 = vmatprep.subr.bf16.mxu0 0
  %1153 = vmatpush1.bf16.msra.mxu0 %v1040
  %1154 = vmatprep.subr.bf16.mxu0 0
  %1155 = vmatpush1.bf16.msra.mxu0 %v1041
  %1156 = vmatprep.subr.bf16.mxu0 0
  %1157 = vmatpush1.bf16.msra.mxu0 %v1042
  %1158 = vmatprep.subr.bf16.mxu0 0
  %1159 = vmatpush1.bf16.msra.mxu0 %v1043
  %1160 = vmatprep.subr.bf16.mxu0 0
  %1161 = vmatpush1.bf16.msra.mxu0 %v1044
  %1162 = vmatprep.subr.bf16.mxu0 0
  %1163 = vmatpush1.bf16.msra.mxu0 %v1045
  %1164 = vmatprep.subr.bf16.mxu0 0
  %1165 = vmatpush1.bf16.msra.mxu0 %v1046
  %1166 = vmatprep.subr.bf16.mxu0 0
  %1167 = vmatpush1.bf16.msra.mxu0 %v1047
  %1168 = vmatprep.mubr.bf16.mxu0 %v183
  %1169 = vmatmul.mubr.bf16.gmra.mrb[0].mxu0 %v182
  %v1170 = vpop.f32.mrb[0].mxu0
  %v1171 = vadd.f32 %v1131, %v1170
  %v1172 = vpop.f32.mrb[0].mxu0
  %v1173 = vpop.f32.mrb[0].mxu0
  %v1174 = vpop.f32.mrb[0].mxu0
  %1175 = vdwg.mxu0
  %1176 = vmatprep.subr.bf16.mxu0 0
  %1177 = vmatpush1.bf16.msra.mxu0 %v1048
  %1178 = vmatprep.subr.bf16.mxu0 0
  %1179 = vmatpush1.bf16.msra.mxu0 %v1049
  %1180 = vmatprep.subr.bf16.mxu0 0
  %1181 = vmatpush1.bf16.msra.mxu0 %v1050
  %1182 = vmatprep.subr.bf16.mxu0 0
  %1183 = vmatpush1.bf16.msra.mxu0 %v1051
  %1184 = vmatprep.subr.bf16.mxu0 0
  %1185 = vmatpush1.bf16.msra.mxu0 %v1052
  %1186 = vmatprep.subr.bf16.mxu0 0
  %1187 = vmatpush1.bf16.msra.mxu0 %v1053
  %1188 = vmatprep.subr.bf16.mxu0 0
  %1189 = vmatpush1.bf16.msra.mxu0 %v1054
  %1190 = vmatprep.subr.bf16.mxu0 0
  %1191 = vmatpush1.bf16.msra.mxu0 %v1055
  %1192 = vmatprep.subr.bf16.mxu0 0
  %1193 = vmatpush1.bf16.msra.mxu0 0
  %1194 = vmatprep.subr.bf16.mxu0 0
  %1195 = vmatpush1.bf16.msra.mxu0 0
  %1196 = vmatprep.subr.bf16.mxu0 0
  %1197 = vmatpush1.bf16.msra.mxu0 0
  %1198 = vmatprep.subr.bf16.mxu0 0
  %1199 = vmatpush1.bf16.msra.mxu0 0
  %1200 = vmatprep.subr.bf16.mxu0 0
  %1201 = vmatpush1.bf16.msra.mxu0 0
  %1202 = vmatprep.subr.bf16.mxu0 0
  %1203 = vmatpush1.bf16.msra.mxu0 0
  %1204 = vmatprep.subr.bf16.mxu0 0
  %1205 = vmatpush1.bf16.msra.mxu0 0
  %1206 = vmatprep.subr.bf16.mxu0 0
  %1207 = vmatpush1.bf16.msra.mxu0 0
  %1208 = vmatprep.mubr.bf16.mxu0 0
  %1209 = vmatmul.mubr.bf16.gmra.mrb[0].mxu0 %v184
  %v1210 = vpop.f32.mrb[0].mxu0
  %v1211 = vadd.f32 %v1171, %v1210
  %v1212 = vpop.f32.mrb[0].mxu0
  %v1213 = vpop.f32.mrb[0].mxu0
  %v1214 = vpop.f32.mrb[0].mxu0
  %1215 = vdwg.mxu0
  %v1216 = vld [vmem:[%s2 + $0xa] sm:$0x1f]
  %s1217 = scalar_lea.vmem %s1, 40
  %v1218 = vld [vmem:[%s1217] ss:$4 sm:$0x1f]
  %v1220 = vlaneseq
  %v1221 = vshrl.u32 %v1220, 7
  %v1222 = vsub.s32 0, %v1221
  %v1223 = vrot.slane %v1218, %v1222
  %v1224 = vlaneseq
  %v1225 = vshrl.u32 %v1224, 7
  %v1226 = vsub.s32 1, %v1225
  %v1227 = vrot.slane %v1218, %v1226
  %v1228 = vlaneseq
  %v1229 = vshrl.u32 %v1228, 7
  %v1230 = vsub.s32 2, %v1229
  %v1231 = vrot.slane %v1218, %v1230
  %v1232 = vlaneseq
  %v1233 = vshrl.u32 %v1232, 7
  %v1234 = vsub.s32 3, %v1233
  %v1235 = vrot.slane %v1218, %v1234
  %v1236 = vlaneseq
  %v1237 = vshrl.u32 %v1236, 7
  %v1238 = vsub.s32 4, %v1237
  %v1239 = vrot.slane %v1218, %v1238
  %v1245 = vmul.f32 %v27, %v1223
  %v1246 = vmul.f32 %v27, %v1227
  %v1247 = vmul.f32 %v27, %v1231
  %v1248 = vmul.f32 %v27, %v1235
  %v1249 = vmul.f32 %v27, %v1239
  %v1251 = vlaneseq
  %v1252 = vshrl.u32 %v1251, 7
  %v1253 = vsub.s32 0, %v1252
  %v1254 = vrot.slane %v1216, %v1253
  %v1255 = vlaneseq
  %v1256 = vshrl.u32 %v1255, 7
  %v1257 = vsub.s32 1, %v1256
  %v1258 = vrot.slane %v1216, %v1257
  %v1259 = vlaneseq
  %v1260 = vshrl.u32 %v1259, 7
  %v1261 = vsub.s32 2, %v1260
  %v1262 = vrot.slane %v1216, %v1261
  %v1263 = vlaneseq
  %v1264 = vshrl.u32 %v1263, 7
  %v1265 = vsub.s32 3, %v1264
  %v1266 = vrot.slane %v1216, %v1265
  %v1267 = vlaneseq
  %v1268 = vshrl.u32 %v1267, 7
  %v1269 = vsub.s32 4, %v1268
  %v1270 = vrot.slane %v1216, %v1269
  %v1276 = vadd.f32 %v1254, %v1245
  %v1277 = vadd.f32 %v1258, %v1246
  %v1278 = vadd.f32 %v1262, %v1247
  %v1279 = vadd.f32 %v1266, %v1248
  %v1280 = vadd.f32 %v1270, %v1249
  %s1281 = scalar_lea.vmem %s1, 41
  %v1282 = vld [vmem:[%s1281] ss:$4 sm:$0x1f]
  %v1284 = vlaneseq
  %v1285 = vshrl.u32 %v1284, 7
  %v1286 = vsub.s32 0, %v1285
  %v1287 = vrot.slane %v1282, %v1286
  %v1288 = vlaneseq
  %v1289 = vshrl.u32 %v1288, 7
  %v1290 = vsub.s32 1, %v1289
  %v1291 = vrot.slane %v1282, %v1290
  %v1292 = vlaneseq
  %v1293 = vshrl.u32 %v1292, 7
  %v1294 = vsub.s32 2, %v1293
  %v1295 = vrot.slane %v1282, %v1294
  %v1296 = vlaneseq
  %v1297 = vshrl.u32 %v1296, 7
  %v1298 = vsub.s32 3, %v1297
  %v1299 = vrot.slane %v1282, %v1298
  %v1300 = vlaneseq
  %v1301 = vshrl.u32 %v1300, 7
  %v1302 = vsub.s32 4, %v1301
  %v1303 = vrot.slane %v1282, %v1302
  %v1309 = vmul.f32 %v95, %v1287
  %v1310 = vmul.f32 %v95, %v1291
  %v1311 = vmul.f32 %v95, %v1295
  %v1312 = vmul.f32 %v95, %v1299
  %v1313 = vmul.f32 %v95, %v1303
  %v1314 = vadd.f32 %v1276, %v1309
  %v1315 = vadd.f32 %v1277, %v1310
  %v1316 = vadd.f32 %v1278, %v1311
  %v1317 = vadd.f32 %v1279, %v1312
  %v1318 = vadd.f32 %v1280, %v1313
  %s1319 = scalar_lea.vmem %s1, 42
  %v1320 = vld [vmem:[%s1319] ss:$4 sm:$0x1f]
  %v1322 = vlaneseq
  %v1323 = vshrl.u32 %v1322, 7
  %v1324 = vsub.s32 0, %v1323
  %v1325 = vrot.slane %v1320, %v1324
  %v1326 = vlaneseq
  %v1327 = vshrl.u32 %v1326, 7
  %v1328 = vsub.s32 1, %v1327
  %v1329 = vrot.slane %v1320, %v1328
  %v1330 = vlaneseq
  %v1331 = vshrl.u32 %v1330, 7
  %v1332 = vsub.s32 2, %v1331
  %v1333 = vrot.slane %v1320, %v1332
  %v1334 = vlaneseq
  %v1335 = vshrl.u32 %v1334, 7
  %v1336 = vsub.s32 3, %v1335
  %v1337 = vrot.slane %v1320, %v1336
  %v1338 = vlaneseq
  %v1339 = vshrl.u32 %v1338, 7
  %v1340 = vsub.s32 4, %v1339
  %v1341 = vrot.slane %v1320, %v1340
  %v1347 = vmul.f32 %v137, %v1325
  %v1348 = vmul.f32 %v137, %v1329
  %v1349 = vmul.f32 %v137, %v1333
  %v1350 = vmul.f32 %v137, %v1337
  %v1351 = vmul.f32 %v137, %v1341
  %v1352 = vadd.f32 %v1314, %v1347
  %v1353 = vadd.f32 %v1315, %v1348
  %v1354 = vadd.f32 %v1316, %v1349
  %v1355 = vadd.f32 %v1317, %v1350
  %v1356 = vadd.f32 %v1318, %v1351
  %v1357 = vmax.f32 %v1352, 0.0
  %v1358 = vmax.f32 %v1353, 0.0
  %v1359 = vmax.f32 %v1354, 0.0
  %v1360 = vmax.f32 %v1355, 0.0
  %v1361 = vmax.f32 %v1356, 0.0
  %v1362 = vpack.c.bf16 %v1357, %v1357
  %v1363 = vpack.c.bf16 %v1358, %v1358
  %v1364 = vpack.c.bf16 %v1359, %v1359
  %v1365 = vpack.c.bf16 %v1360, %v1360
  %v1366 = vpack.c.bf16 %v1361, %v1361
  %v1367 = vld [vmem:[%s3 + $0x280] sm:$0xf]
  %v1368 = vld [vmem:[%s3 + $0x284] sm:$0xf]
  %v1369 = vld [vmem:[%s3 + $0x288] sm:$0xf]
  %v1370 = vld [vmem:[%s3 + $0x28c] sm:$0xf]
  %v1371 = vld [vmem:[%s3 + $0x290] sm:$0xf]
  %v1372 = vld [vmem:[%s3 + $0x294] sm:$0xf]
  %v1373 = vld [vmem:[%s3 + $0x298] sm:$0xf]
  %v1374 = vld [vmem:[%s3 + $0x29c] sm:$0xf]
  %v1375 = vld [vmem:[%s3 + $0x2a0] sm:$0xf]
  %v1376 = vld [vmem:[%s3 + $0x2a4] sm:$0xf]
  %v1377 = vld [vmem:[%s3 + $0x2a8] sm:$0xf]
  %v1378 = vld [vmem:[%s3 + $0x2ac] sm:$0xf]
  %v1379 = vld [vmem:[%s3 + $0x2b0] sm:$0xf]
  %v1380 = vld [vmem:[%s3 + $0x2b4] sm:$0xf]
  %v1381 = vld [vmem:[%s3 + $0x2b8] sm:$0xf]
  %v1382 = vld [vmem:[%s3 + $0x2bc] sm:$0xf]
  %v1383 = vld [vmem:[%s3 + $0x2c0] sm:$0xf]
  %v1384 = vld [vmem:[%s3 + $0x2c4] sm:$0xf]
  %v1385 = vld [vmem:[%s3 + $0x2c8] sm:$0xf]
  %v1386 = vld [vmem:[%s3 + $0x2cc] sm:$0xf]
  %v1387 = vld [vmem:[%s3 + $0x2d0] sm:$0xf]
  %v1388 = vld [vmem:[%s3 + $0x2d4] sm:$0xf]
  %v1389 = vld [vmem:[%s3 + $0x2d8] sm:$0xf]
  %v1390 = vld [vmem:[%s3 + $0x2dc] sm:$0xf]
  %v1391 = vld [vmem:[%s3 + $0x2e0] sm:$0xf]
  %v1392 = vld [vmem:[%s3 + $0x2e4] sm:$0xf]
  %v1393 = vld [vmem:[%s3 + $0x2e8] sm:$0xf]
  %v1394 = vld [vmem:[%s3 + $0x2ec] sm:$0xf]
  %v1395 = vld [vmem:[%s3 + $0x2f0] sm:$0xf]
  %v1396 = vld [vmem:[%s3 + $0x2f4] sm:$0xf]
  %v1397 = vld [vmem:[%s3 + $0x2f8] sm:$0xf]
  %v1398 = vld [vmem:[%s3 + $0x2fc] sm:$0xf]
  %v1399 = vld [vmem:[%s3 + $0x300] sm:$0xf]
  %v1400 = vld [vmem:[%s3 + $0x304] sm:$0xf]
  %v1401 = vld [vmem:[%s3 + $0x308] sm:$0xf]
  %v1402 = vld [vmem:[%s3 + $0x30c] sm:$0xf]
  %v1403 = vld [vmem:[%s3 + $0x310] sm:$0xf]
  %v1404 = vld [vmem:[%s3 + $0x314] sm:$0xf]
  %v1405 = vld [vmem:[%s3 + $0x318] sm:$0xf]
  %v1406 = vld [vmem:[%s3 + $0x31c] sm:$0xf]
  %v1407 = vld [vmem:[%s3 + $0x320] sm:$0xf]
  %v1408 = vld [vmem:[%s3 + $0x324] sm:$0xf]
  %v1409 = vld [vmem:[%s3 + $0x328] sm:$0xf]
  %v1410 = vld [vmem:[%s3 + $0x32c] sm:$0xf]
  %v1411 = vld [vmem:[%s3 + $0x330] sm:$0xf]
  %v1412 = vld [vmem:[%s3 + $0x334] sm:$0xf]
  %v1413 = vld [vmem:[%s3 + $0x338] sm:$0xf]
  %v1414 = vld [vmem:[%s3 + $0x33c] sm:$0xf]
  %v1415 = vld [vmem:[%s3 + $0x340] sm:$0xf]
  %v1416 = vld [vmem:[%s3 + $0x344] sm:$0xf]
  %v1417 = vld [vmem:[%s3 + $0x348] sm:$0xf]
  %v1418 = vld [vmem:[%s3 + $0x34c] sm:$0xf]
  %v1419 = vld [vmem:[%s3 + $0x350] sm:$0xf]
  %v1420 = vld [vmem:[%s3 + $0x354] sm:$0xf]
  %v1421 = vld [vmem:[%s3 + $0x358] sm:$0xf]
  %v1422 = vld [vmem:[%s3 + $0x35c] sm:$0xf]
  %v1423 = vld [vmem:[%s3 + $0x360] sm:$0xf]
  %v1424 = vld [vmem:[%s3 + $0x364] sm:$0xf]
  %v1425 = vld [vmem:[%s3 + $0x368] sm:$0xf]
  %v1426 = vld [vmem:[%s3 + $0x36c] sm:$0xf]
  %v1427 = vld [vmem:[%s3 + $0x370] sm:$0xf]
  %v1428 = vld [vmem:[%s3 + $0x374] sm:$0xf]
  %v1429 = vld [vmem:[%s3 + $0x378] sm:$0xf]
  %v1430 = vld [vmem:[%s3 + $0x37c] sm:$0xf]
  %v1431 = vld [vmem:[%s3 + $0x380] sm:$0xf]
  %v1432 = vld [vmem:[%s3 + $0x384] sm:$0xf]
  %v1433 = vld [vmem:[%s3 + $0x388] sm:$0xf]
  %v1434 = vld [vmem:[%s3 + $0x38c] sm:$0xf]
  %v1435 = vld [vmem:[%s3 + $0x390] sm:$0xf]
  %v1436 = vld [vmem:[%s3 + $0x394] sm:$0xf]
  %v1437 = vld [vmem:[%s3 + $0x398] sm:$0xf]
  %v1438 = vld [vmem:[%s3 + $0x39c] sm:$0xf]
  %v1439 = vld [vmem:[%s3 + $0x3a0] sm:$0xf]
  %v1440 = vld [vmem:[%s3 + $0x3a4] sm:$0xf]
  %v1441 = vld [vmem:[%s3 + $0x3a8] sm:$0xf]
  %v1442 = vld [vmem:[%s3 + $0x3ac] sm:$0xf]
  %v1443 = vld [vmem:[%s3 + $0x3b0] sm:$0xf]
  %v1444 = vld [vmem:[%s3 + $0x3b4] sm:$0xf]
  %v1445 = vld [vmem:[%s3 + $0x3b8] sm:$0xf]
  %v1446 = vld [vmem:[%s3 + $0x3bc] sm:$0xf]
  %v1527 = vunpack.c.l.b16 %v1367
  %v1528 = vunpack.c.l.b16 %v1368
  %v1529 = vunpack.c.l.b16 %v1369
  %v1530 = vunpack.c.l.b16 %v1370
  %v1531 = vunpack.c.l.b16 %v1371
  %v1532 = vunpack.c.l.b16 %v1372
  %v1533 = vunpack.c.l.b16 %v1373
  %v1534 = vunpack.c.l.b16 %v1374
  %v1535 = vunpack.c.l.b16 %v1375
  %v1536 = vunpack.c.l.b16 %v1376
  %v1537 = vunpack.c.l.b16 %v1377
  %v1538 = vunpack.c.l.b16 %v1378
  %v1539 = vunpack.c.l.b16 %v1379
  %v1540 = vunpack.c.l.b16 %v1380
  %v1541 = vunpack.c.l.b16 %v1381
  %v1542 = vunpack.c.l.b16 %v1382
  %v1543 = vunpack.c.l.b16 %v1383
  %v1544 = vunpack.c.l.b16 %v1384
  %v1545 = vunpack.c.l.b16 %v1385
  %v1546 = vunpack.c.l.b16 %v1386
  %v1547 = vunpack.c.l.b16 %v1387
  %v1548 = vunpack.c.l.b16 %v1388
  %v1549 = vunpack.c.l.b16 %v1389
  %v1550 = vunpack.c.l.b16 %v1390
  %v1551 = vunpack.c.l.b16 %v1391
  %v1552 = vunpack.c.l.b16 %v1392
  %v1553 = vunpack.c.l.b16 %v1393
  %v1554 = vunpack.c.l.b16 %v1394
  %v1555 = vunpack.c.l.b16 %v1395
  %v1556 = vunpack.c.l.b16 %v1396
  %v1557 = vunpack.c.l.b16 %v1397
  %v1558 = vunpack.c.l.b16 %v1398
  %v1559 = vunpack.c.l.b16 %v1399
  %v1560 = vunpack.c.l.b16 %v1400
  %v1561 = vunpack.c.l.b16 %v1401
  %v1562 = vunpack.c.l.b16 %v1402
  %v1563 = vunpack.c.l.b16 %v1403
  %v1564 = vunpack.c.l.b16 %v1404
  %v1565 = vunpack.c.l.b16 %v1405
  %v1566 = vunpack.c.l.b16 %v1406
  %v1567 = vunpack.c.l.b16 %v1407
  %v1568 = vunpack.c.l.b16 %v1408
  %v1569 = vunpack.c.l.b16 %v1409
  %v1570 = vunpack.c.l.b16 %v1410
  %v1571 = vunpack.c.l.b16 %v1411
  %v1572 = vunpack.c.l.b16 %v1412
  %v1573 = vunpack.c.l.b16 %v1413
  %v1574 = vunpack.c.l.b16 %v1414
  %v1575 = vunpack.c.l.b16 %v1415
  %v1576 = vunpack.c.l.b16 %v1416
  %v1577 = vunpack.c.l.b16 %v1417
  %v1578 = vunpack.c.l.b16 %v1418
  %v1579 = vunpack.c.l.b16 %v1419
  %v1580 = vunpack.c.l.b16 %v1420
  %v1581 = vunpack.c.l.b16 %v1421
  %v1582 = vunpack.c.l.b16 %v1422
  %v1583 = vunpack.c.l.b16 %v1423
  %v1584 = vunpack.c.l.b16 %v1424
  %v1585 = vunpack.c.l.b16 %v1425
  %v1586 = vunpack.c.l.b16 %v1426
  %v1587 = vunpack.c.l.b16 %v1427
  %v1588 = vunpack.c.l.b16 %v1428
  %v1589 = vunpack.c.l.b16 %v1429
  %v1590 = vunpack.c.l.b16 %v1430
  %v1591 = vunpack.c.l.b16 %v1431
  %v1592 = vunpack.c.l.b16 %v1432
  %v1593 = vunpack.c.l.b16 %v1433
  %v1594 = vunpack.c.l.b16 %v1434
  %v1595 = vunpack.c.l.b16 %v1435
  %v1596 = vunpack.c.l.b16 %v1436
  %v1597 = vunpack.c.l.b16 %v1437
  %v1598 = vunpack.c.l.b16 %v1438
  %v1599 = vunpack.c.l.b16 %v1439
  %v1600 = vunpack.c.l.b16 %v1440
  %v1601 = vunpack.c.l.b16 %v1441
  %v1602 = vunpack.c.l.b16 %v1442
  %v1603 = vunpack.c.l.b16 %v1443
  %v1604 = vunpack.c.l.b16 %v1444
  %v1605 = vunpack.c.l.b16 %v1445
  %v1606 = vunpack.c.l.b16 %v1446
  %v1607 = vpack.c.b16 %v1528, %v1527
  %v1608 = vpack.c.b16 %v1530, %v1529
  %v1609 = vpack.c.b16 %v1532, %v1531
  %v1610 = vpack.c.b16 %v1534, %v1533
  %v1611 = vpack.c.b16 %v1536, %v1535
  %v1612 = vpack.c.b16 %v1538, %v1537
  %v1613 = vpack.c.b16 %v1540, %v1539
  %v1614 = vpack.c.b16 %v1542, %v1541
  %v1615 = vpack.c.b16 %v1544, %v1543
  %v1616 = vpack.c.b16 %v1546, %v1545
  %v1617 = vpack.c.b16 %v1548, %v1547
  %v1618 = vpack.c.b16 %v1550, %v1549
  %v1619 = vpack.c.b16 %v1552, %v1551
  %v1620 = vpack.c.b16 %v1554, %v1553
  %v1621 = vpack.c.b16 %v1556, %v1555
  %v1622 = vpack.c.b16 %v1558, %v1557
  %v1623 = vpack.c.b16 %v1560, %v1559
  %v1624 = vpack.c.b16 %v1562, %v1561
  %v1625 = vpack.c.b16 %v1564, %v1563
  %v1626 = vpack.c.b16 %v1566, %v1565
  %v1627 = vpack.c.b16 %v1568, %v1567
  %v1628 = vpack.c.b16 %v1570, %v1569
  %v1629 = vpack.c.b16 %v1572, %v1571
  %v1630 = vpack.c.b16 %v1574, %v1573
  %v1631 = vpack.c.b16 %v1576, %v1575
  %v1632 = vpack.c.b16 %v1578, %v1577
  %v1633 = vpack.c.b16 %v1580, %v1579
  %v1634 = vpack.c.b16 %v1582, %v1581
  %v1635 = vpack.c.b16 %v1584, %v1583
  %v1636 = vpack.c.b16 %v1586, %v1585
  %v1637 = vpack.c.b16 %v1588, %v1587
  %v1638 = vpack.c.b16 %v1590, %v1589
  %v1639 = vpack.c.b16 %v1592, %v1591
  %v1640 = vpack.c.b16 %v1594, %v1593
  %v1641 = vpack.c.b16 %v1596, %v1595
  %v1642 = vpack.c.b16 %v1598, %v1597
  %v1643 = vpack.c.b16 %v1600, %v1599
  %v1644 = vpack.c.b16 %v1602, %v1601
  %v1645 = vpack.c.b16 %v1604, %v1603
  %v1646 = vpack.c.b16 %v1606, %v1605
  %1687 = vmatprep.subr.bf16.mxu0 0
  %1688 = vmatpush1.bf16.msra.mxu0 %v1607
  %1689 = vmatprep.subr.bf16.mxu0 0
  %1690 = vmatpush1.bf16.msra.mxu0 %v1608
  %1691 = vmatprep.subr.bf16.mxu0 0
  %1692 = vmatpush1.bf16.msra.mxu0 %v1609
  %1693 = vmatprep.subr.bf16.mxu0 0
  %1694 = vmatpush1.bf16.msra.mxu0 %v1610
  %1695 = vmatprep.subr.bf16.mxu0 0
  %1696 = vmatpush1.bf16.msra.mxu0 %v1611
  %1697 = vmatprep.subr.bf16.mxu0 0
  %1698 = vmatpush1.bf16.msra.mxu0 %v1612
  %1699 = vmatprep.subr.bf16.mxu0 0
  %1700 = vmatpush1.bf16.msra.mxu0 %v1613
  %1701 = vmatprep.subr.bf16.mxu0 0
  %1702 = vmatpush1.bf16.msra.mxu0 %v1614
  %1703 = vmatprep.subr.bf16.mxu0 0
  %1704 = vmatpush1.bf16.msra.mxu0 %v1615
  %1705 = vmatprep.subr.bf16.mxu0 0
  %1706 = vmatpush1.bf16.msra.mxu0 %v1616
  %1707 = vmatprep.subr.bf16.mxu0 0
  %1708 = vmatpush1.bf16.msra.mxu0 %v1617
  %1709 = vmatprep.subr.bf16.mxu0 0
  %1710 = vmatpush1.bf16.msra.mxu0 %v1618
  %1711 = vmatprep.subr.bf16.mxu0 0
  %1712 = vmatpush1.bf16.msra.mxu0 %v1619
  %1713 = vmatprep.subr.bf16.mxu0 0
  %1714 = vmatpush1.bf16.msra.mxu0 %v1620
  %1715 = vmatprep.subr.bf16.mxu0 0
  %1716 = vmatpush1.bf16.msra.mxu0 %v1621
  %1717 = vmatprep.subr.bf16.mxu0 0
  %1718 = vmatpush1.bf16.msra.mxu0 %v1622
  %1719 = vmatprep.mubr.bf16.mxu0 %v1363
  %1720 = vmatmul.mubr.bf16.gmra.mrb[0].mxu0 %v1362
  %v1721 = vpop.f32.mrb[0].mxu0
  %v1722 = vadd.f32 0.0, %v1721
  %v1723 = vpop.f32.mrb[0].mxu0
  %v1724 = vpop.f32.mrb[0].mxu0
  %v1725 = vpop.f32.mrb[0].mxu0
  %1726 = vdwg.mxu0
  %1727 = vmatprep.subr.bf16.mxu0 0
  %1728 = vmatpush1.bf16.msra.mxu0 %v1623
  %1729 = vmatprep.subr.bf16.mxu0 0
  %1730 = vmatpush1.bf16.msra.mxu0 %v1624
  %1731 = vmatprep.subr.bf16.mxu0 0
  %1732 = vmatpush1.bf16.msra.mxu0 %v1625
  %1733 = vmatprep.subr.bf16.mxu0 0
  %1734 = vmatpush1.bf16.msra.mxu0 %v1626
  %1735 = vmatprep.subr.bf16.mxu0 0
  %1736 = vmatpush1.bf16.msra.mxu0 %v1627
  %1737 = vmatprep.subr.bf16.mxu0 0
  %1738 = vmatpush1.bf16.msra.mxu0 %v1628
  %1739 = vmatprep.subr.bf16.mxu0 0
  %1740 = vmatpush1.bf16.msra.mxu0 %v1629
  %1741 = vmatprep.subr.bf16.mxu0 0
  %1742 = vmatpush1.bf16.msra.mxu0 %v1630
  %1743 = vmatprep.subr.bf16.mxu0 0
  %1744 = vmatpush1.bf16.msra.mxu0 %v1631
  %1745 = vmatprep.subr.bf16.mxu0 0
  %1746 = vmatpush1.bf16.msra.mxu0 %v1632
  %1747 = vmatprep.subr.bf16.mxu0 0
  %1748 = vmatpush1.bf16.msra.mxu0 %v1633
  %1749 = vmatprep.subr.bf16.mxu0 0
  %1750 = vmatpush1.bf16.msra.mxu0 %v1634
  %1751 = vmatprep.subr.bf16.mxu0 0
  %1752 = vmatpush1.bf16.msra.mxu0 %v1635
  %1753 = vmatprep.subr.bf16.mxu0 0
  %1754 = vmatpush1.bf16.msra.mxu0 %v1636
  %1755 = vmatprep.subr.bf16.mxu0 0
  %1756 = vmatpush1.bf16.msra.mxu0 %v1637
  %1757 = vmatprep.subr.bf16.mxu0 0
  %1758 = vmatpush1.bf16.msra.mxu0 %v1638
  %1759 = vmatprep.mubr.bf16.mxu0 %v1365
  %1760 = vmatmul.mubr.bf16.gmra.mrb[0].mxu0 %v1364
  %v1761 = vpop.f32.mrb[0].mxu0
  %v1762 = vadd.f32 %v1722, %v1761
  %v1763 = vpop.f32.mrb[0].mxu0
  %v1764 = vpop.f32.mrb[0].mxu0
  %v1765 = vpop.f32.mrb[0].mxu0
  %1766 = vdwg.mxu0
  %1767 = vmatprep.subr.bf16.mxu0 0
  %1768 = vmatpush1.bf16.msra.mxu0 %v1639
  %1769 = vmatprep.subr.bf16.mxu0 0
  %1770 = vmatpush1.bf16.msra.mxu0 %v1640
  %1771 = vmatprep.subr.bf16.mxu0 0
  %1772 = vmatpush1.bf16.msra.mxu0 %v1641
  %1773 = vmatprep.subr.bf16.mxu0 0
  %1774 = vmatpush1.bf16.msra.mxu0 %v1642
  %1775 = vmatprep.subr.bf16.mxu0 0
  %1776 = vmatpush1.bf16.msra.mxu0 %v1643
  %1777 = vmatprep.subr.bf16.mxu0 0
  %1778 = vmatpush1.bf16.msra.mxu0 %v1644
  %1779 = vmatprep.subr.bf16.mxu0 0
  %1780 = vmatpush1.bf16.msra.mxu0 %v1645
  %1781 = vmatprep.subr.bf16.mxu0 0
  %1782 = vmatpush1.bf16.msra.mxu0 %v1646
  %1783 = vmatprep.subr.bf16.mxu0 0
  %1784 = vmatpush1.bf16.msra.mxu0 0
  %1785 = vmatprep.subr.bf16.mxu0 0
  %1786 = vmatpush1.bf16.msra.mxu0 0
  %1787 = vmatprep.subr.bf16.mxu0 0
  %1788 = vmatpush1.bf16.msra.mxu0 0
  %1789 = vmatprep.subr.bf16.mxu0 0
  %1790 = vmatpush1.bf16.msra.mxu0 0
  %1791 = vmatprep.subr.bf16.mxu0 0
  %1792 = vmatpush1.bf16.msra.mxu0 0
  %1793 = vmatprep.subr.bf16.mxu0 0
  %1794 = vmatpush1.bf16.msra.mxu0 0
  %1795 = vmatprep.subr.bf16.mxu0 0
  %1796 = vmatpush1.bf16.msra.mxu0 0
  %1797 = vmatprep.subr.bf16.mxu0 0
  %1798 = vmatpush1.bf16.msra.mxu0 0
  %1799 = vmatprep.mubr.bf16.mxu0 0
  %1800 = vmatmul.mubr.bf16.gmra.mrb[0].mxu0 %v1366
  %v1801 = vpop.f32.mrb[0].mxu0
  %v1802 = vadd.f32 %v1762, %v1801
  %v1803 = vpop.f32.mrb[0].mxu0
  %v1804 = vpop.f32.mrb[0].mxu0
  %v1805 = vpop.f32.mrb[0].mxu0
  %1806 = vdwg.mxu0
  %v1807 = vadd.f32 %v1211, %v1802
  %v1808 = vld [vmem:[%s2 + $0xf] sm:$0x1f]
  %s1809 = scalar_lea.vmem %s1, 60
  %v1810 = vld [vmem:[%s1809] ss:$4 sm:$0x1f]
  %v1812 = vlaneseq
  %v1813 = vshrl.u32 %v1812, 7
  %v1814 = vsub.s32 0, %v1813
  %v1815 = vrot.slane %v1810, %v1814
  %v1816 = vlaneseq
  %v1817 = vshrl.u32 %v1816, 7
  %v1818 = vsub.s32 1, %v1817
  %v1819 = vrot.slane %v1810, %v1818
  %v1820 = vlaneseq
  %v1821 = vshrl.u32 %v1820, 7
  %v1822 = vsub.s32 2, %v1821
  %v1823 = vrot.slane %v1810, %v1822
  %v1824 = vlaneseq
  %v1825 = vshrl.u32 %v1824, 7
  %v1826 = vsub.s32 3, %v1825
  %v1827 = vrot.slane %v1810, %v1826
  %v1828 = vlaneseq
  %v1829 = vshrl.u32 %v1828, 7
  %v1830 = vsub.s32 4, %v1829
  %v1831 = vrot.slane %v1810, %v1830
  %v1837 = vmul.f32 %v27, %v1815
  %v1838 = vmul.f32 %v27, %v1819
  %v1839 = vmul.f32 %v27, %v1823
  %v1840 = vmul.f32 %v27, %v1827
  %v1841 = vmul.f32 %v27, %v1831
  %v1843 = vlaneseq
  %v1844 = vshrl.u32 %v1843, 7
  %v1845 = vsub.s32 0, %v1844
  %v1846 = vrot.slane %v1808, %v1845
  %v1847 = vlaneseq
  %v1848 = vshrl.u32 %v1847, 7
  %v1849 = vsub.s32 1, %v1848
  %v1850 = vrot.slane %v1808, %v1849
  %v1851 = vlaneseq
  %v1852 = vshrl.u32 %v1851, 7
  %v1853 = vsub.s32 2, %v1852
  %v1854 = vrot.slane %v1808, %v1853
  %v1855 = vlaneseq
  %v1856 = vshrl.u32 %v1855, 7
  %v1857 = vsub.s32 3, %v1856
  %v1858 = vrot.slane %v1808, %v1857
  %v1859 = vlaneseq
  %v1860 = vshrl.u32 %v1859, 7
  %v1861 = vsub.s32 4, %v1860
  %v1862 = vrot.slane %v1808, %v1861
  %v1868 = vadd.f32 %v1846, %v1837
  %v1869 = vadd.f32 %v1850, %v1838
  %v1870 = vadd.f32 %v1854, %v1839
  %v1871 = vadd.f32 %v1858, %v1840
  %v1872 = vadd.f32 %v1862, %v1841
  %s1873 = scalar_lea.vmem %s1, 61
  %v1874 = vld [vmem:[%s1873] ss:$4 sm:$0x1f]
  %v1876 = vlaneseq
  %v1877 = vshrl.u32 %v1876, 7
  %v1878 = vsub.s32 0, %v1877
  %v1879 = vrot.slane %v1874, %v1878
  %v1880 = vlaneseq
  %v1881 = vshrl.u32 %v1880, 7
  %v1882 = vsub.s32 1, %v1881
  %v1883 = vrot.slane %v1874, %v1882
  %v1884 = vlaneseq
  %v1885 = vshrl.u32 %v1884, 7
  %v1886 = vsub.s32 2, %v1885
  %v1887 = vrot.slane %v1874, %v1886
  %v1888 = vlaneseq
  %v1889 = vshrl.u32 %v1888, 7
  %v1890 = vsub.s32 3, %v1889
  %v1891 = vrot.slane %v1874, %v1890
  %v1892 = vlaneseq
  %v1893 = vshrl.u32 %v1892, 7
  %v1894 = vsub.s32 4, %v1893
  %v1895 = vrot.slane %v1874, %v1894
  %v1901 = vmul.f32 %v95, %v1879
  %v1902 = vmul.f32 %v95, %v1883
  %v1903 = vmul.f32 %v95, %v1887
  %v1904 = vmul.f32 %v95, %v1891
  %v1905 = vmul.f32 %v95, %v1895
  %v1906 = vadd.f32 %v1868, %v1901
  %v1907 = vadd.f32 %v1869, %v1902
  %v1908 = vadd.f32 %v1870, %v1903
  %v1909 = vadd.f32 %v1871, %v1904
  %v1910 = vadd.f32 %v1872, %v1905
  %s1911 = scalar_lea.vmem %s1, 62
  %v1912 = vld [vmem:[%s1911] ss:$4 sm:$0x1f]
  %v1914 = vlaneseq
  %v1915 = vshrl.u32 %v1914, 7
  %v1916 = vsub.s32 0, %v1915
  %v1917 = vrot.slane %v1912, %v1916
  %v1918 = vlaneseq
  %v1919 = vshrl.u32 %v1918, 7
  %v1920 = vsub.s32 1, %v1919
  %v1921 = vrot.slane %v1912, %v1920
  %v1922 = vlaneseq
  %v1923 = vshrl.u32 %v1922, 7
  %v1924 = vsub.s32 2, %v1923
  %v1925 = vrot.slane %v1912, %v1924
  %v1926 = vlaneseq
  %v1927 = vshrl.u32 %v1926, 7
  %v1928 = vsub.s32 3, %v1927
  %v1929 = vrot.slane %v1912, %v1928
  %v1930 = vlaneseq
  %v1931 = vshrl.u32 %v1930, 7
  %v1932 = vsub.s32 4, %v1931
  %v1933 = vrot.slane %v1912, %v1932
  %v1939 = vmul.f32 %v137, %v1917
  %v1940 = vmul.f32 %v137, %v1921
  %v1941 = vmul.f32 %v137, %v1925
  %v1942 = vmul.f32 %v137, %v1929
  %v1943 = vmul.f32 %v137, %v1933
  %v1944 = vadd.f32 %v1906, %v1939
  %v1945 = vadd.f32 %v1907, %v1940
  %v1946 = vadd.f32 %v1908, %v1941
  %v1947 = vadd.f32 %v1909, %v1942
  %v1948 = vadd.f32 %v1910, %v1943
  %v1949 = vmax.f32 %v1944, 0.0
  %v1950 = vmax.f32 %v1945, 0.0
  %v1951 = vmax.f32 %v1946, 0.0
  %v1952 = vmax.f32 %v1947, 0.0
  %v1953 = vmax.f32 %v1948, 0.0
  %v1954 = vpack.c.bf16 %v1949, %v1949
  %v1955 = vpack.c.bf16 %v1950, %v1950
  %v1956 = vpack.c.bf16 %v1951, %v1951
  %v1957 = vpack.c.bf16 %v1952, %v1952
  %v1958 = vpack.c.bf16 %v1953, %v1953
  %v1959 = vld [vmem:[%s3 + $0x3c0] sm:$0xf]
  %v1960 = vld [vmem:[%s3 + $0x3c4] sm:$0xf]
  %v1961 = vld [vmem:[%s3 + $0x3c8] sm:$0xf]
  %v1962 = vld [vmem:[%s3 + $0x3cc] sm:$0xf]
  %v1963 = vld [vmem:[%s3 + $0x3d0] sm:$0xf]
  %v1964 = vld [vmem:[%s3 + $0x3d4] sm:$0xf]
  %v1965 = vld [vmem:[%s3 + $0x3d8] sm:$0xf]
  %v1966 = vld [vmem:[%s3 + $0x3dc] sm:$0xf]
  %v1967 = vld [vmem:[%s3 + $0x3e0] sm:$0xf]
  %v1968 = vld [vmem:[%s3 + $0x3e4] sm:$0xf]
  %v1969 = vld [vmem:[%s3 + $0x3e8] sm:$0xf]
  %v1970 = vld [vmem:[%s3 + $0x3ec] sm:$0xf]
  %v1971 = vld [vmem:[%s3 + $0x3f0] sm:$0xf]
  %v1972 = vld [vmem:[%s3 + $0x3f4] sm:$0xf]
  %v1973 = vld [vmem:[%s3 + $0x3f8] sm:$0xf]
  %v1974 = vld [vmem:[%s3 + $0x3fc] sm:$0xf]
  %v1975 = vld [vmem:[%s3 + $0x400] sm:$0xf]
  %v1976 = vld [vmem:[%s3 + $0x404] sm:$0xf]
  %v1977 = vld [vmem:[%s3 + $0x408] sm:$0xf]
  %v1978 = vld [vmem:[%s3 + $0x40c] sm:$0xf]
  %v1979 = vld [vmem:[%s3 + $0x410] sm:$0xf]
  %v1980 = vld [vmem:[%s3 + $0x414] sm:$0xf]
  %v1981 = vld [vmem:[%s3 + $0x418] sm:$0xf]
  %v1982 = vld [vmem:[%s3 + $0x41c] sm:$0xf]
  %v1983 = vld [vmem:[%s3 + $0x420] sm:$0xf]
  %v1984 = vld [vmem:[%s3 + $0x424] sm:$0xf]
  %v1985 = vld [vmem:[%s3 + $0x428] sm:$0xf]
  %v1986 = vld [vmem:[%s3 + $0x42c] sm:$0xf]
  %v1987 = vld [vmem:[%s3 + $0x430] sm:$0xf]
  %v1988 = vld [vmem:[%s3 + $0x434] sm:$0xf]
  %v1989 = vld [vmem:[%s3 + $0x438] sm:$0xf]
  %v1990 = vld [vmem:[%s3 + $0x43c] sm:$0xf]
  %v1991 = vld [vmem:[%s3 + $0x440] sm:$0xf]
  %v1992 = vld [vmem:[%s3 + $0x444] sm:$0xf]
  %v1993 = vld [vmem:[%s3 + $0x448] sm:$0xf]
  %v1994 = vld [vmem:[%s3 + $0x44c] sm:$0xf]
  %v1995 = vld [vmem:[%s3 + $0x450] sm:$0xf]
  %v1996 = vld [vmem:[%s3 + $0x454] sm:$0xf]
  %v1997 = vld [vmem:[%s3 + $0x458] sm:$0xf]
  %v1998 = vld [vmem:[%s3 + $0x45c] sm:$0xf]
  %v1999 = vld [vmem:[%s3 + $0x460] sm:$0xf]
  %v2000 = vld [vmem:[%s3 + $0x464] sm:$0xf]
  %v2001 = vld [vmem:[%s3 + $0x468] sm:$0xf]
  %v2002 = vld [vmem:[%s3 + $0x46c] sm:$0xf]
  %v2003 = vld [vmem:[%s3 + $0x470] sm:$0xf]
  %v2004 = vld [vmem:[%s3 + $0x474] sm:$0xf]
  %v2005 = vld [vmem:[%s3 + $0x478] sm:$0xf]
  %v2006 = vld [vmem:[%s3 + $0x47c] sm:$0xf]
  %v2007 = vld [vmem:[%s3 + $0x480] sm:$0xf]
  %v2008 = vld [vmem:[%s3 + $0x484] sm:$0xf]
  %v2009 = vld [vmem:[%s3 + $0x488] sm:$0xf]
  %v2010 = vld [vmem:[%s3 + $0x48c] sm:$0xf]
  %v2011 = vld [vmem:[%s3 + $0x490] sm:$0xf]
  %v2012 = vld [vmem:[%s3 + $0x494] sm:$0xf]
  %v2013 = vld [vmem:[%s3 + $0x498] sm:$0xf]
  %v2014 = vld [vmem:[%s3 + $0x49c] sm:$0xf]
  %v2015 = vld [vmem:[%s3 + $0x4a0] sm:$0xf]
  %v2016 = vld [vmem:[%s3 + $0x4a4] sm:$0xf]
  %v2017 = vld [vmem:[%s3 + $0x4a8] sm:$0xf]
  %v2018 = vld [vmem:[%s3 + $0x4ac] sm:$0xf]
  %v2019 = vld [vmem:[%s3 + $0x4b0] sm:$0xf]
  %v2020 = vld [vmem:[%s3 + $0x4b4] sm:$0xf]
  %v2021 = vld [vmem:[%s3 + $0x4b8] sm:$0xf]
  %v2022 = vld [vmem:[%s3 + $0x4bc] sm:$0xf]
  %v2023 = vld [vmem:[%s3 + $0x4c0] sm:$0xf]
  %v2024 = vld [vmem:[%s3 + $0x4c4] sm:$0xf]
  %v2025 = vld [vmem:[%s3 + $0x4c8] sm:$0xf]
  %v2026 = vld [vmem:[%s3 + $0x4cc] sm:$0xf]
  %v2027 = vld [vmem:[%s3 + $0x4d0] sm:$0xf]
  %v2028 = vld [vmem:[%s3 + $0x4d4] sm:$0xf]
  %v2029 = vld [vmem:[%s3 + $0x4d8] sm:$0xf]
  %v2030 = vld [vmem:[%s3 + $0x4dc] sm:$0xf]
  %v2031 = vld [vmem:[%s3 + $0x4e0] sm:$0xf]
  %v2032 = vld [vmem:[%s3 + $0x4e4] sm:$0xf]
  %v2033 = vld [vmem:[%s3 + $0x4e8] sm:$0xf]
  %v2034 = vld [vmem:[%s3 + $0x4ec] sm:$0xf]
  %v2035 = vld [vmem:[%s3 + $0x4f0] sm:$0xf]
  %v2036 = vld [vmem:[%s3 + $0x4f4] sm:$0xf]
  %v2037 = vld [vmem:[%s3 + $0x4f8] sm:$0xf]
  %v2038 = vld [vmem:[%s3 + $0x4fc] sm:$0xf]
  %v2119 = vunpack.c.l.b16 %v1959
  %v2120 = vunpack.c.l.b16 %v1960
  %v2121 = vunpack.c.l.b16 %v1961
  %v2122 = vunpack.c.l.b16 %v1962
  %v2123 = vunpack.c.l.b16 %v1963
  %v2124 = vunpack.c.l.b16 %v1964
  %v2125 = vunpack.c.l.b16 %v1965
  %v2126 = vunpack.c.l.b16 %v1966
  %v2127 = vunpack.c.l.b16 %v1967
  %v2128 = vunpack.c.l.b16 %v1968
  %v2129 = vunpack.c.l.b16 %v1969
  %v2130 = vunpack.c.l.b16 %v1970
  %v2131 = vunpack.c.l.b16 %v1971
  %v2132 = vunpack.c.l.b16 %v1972
  %v2133 = vunpack.c.l.b16 %v1973
  %v2134 = vunpack.c.l.b16 %v1974
  %v2135 = vunpack.c.l.b16 %v1975
  %v2136 = vunpack.c.l.b16 %v1976
  %v2137 = vunpack.c.l.b16 %v1977
  %v2138 = vunpack.c.l.b16 %v1978
  %v2139 = vunpack.c.l.b16 %v1979
  %v2140 = vunpack.c.l.b16 %v1980
  %v2141 = vunpack.c.l.b16 %v1981
  %v2142 = vunpack.c.l.b16 %v1982
  %v2143 = vunpack.c.l.b16 %v1983
  %v2144 = vunpack.c.l.b16 %v1984
  %v2145 = vunpack.c.l.b16 %v1985
  %v2146 = vunpack.c.l.b16 %v1986
  %v2147 = vunpack.c.l.b16 %v1987
  %v2148 = vunpack.c.l.b16 %v1988
  %v2149 = vunpack.c.l.b16 %v1989
  %v2150 = vunpack.c.l.b16 %v1990
  %v2151 = vunpack.c.l.b16 %v1991
  %v2152 = vunpack.c.l.b16 %v1992
  %v2153 = vunpack.c.l.b16 %v1993
  %v2154 = vunpack.c.l.b16 %v1994
  %v2155 = vunpack.c.l.b16 %v1995
  %v2156 = vunpack.c.l.b16 %v1996
  %v2157 = vunpack.c.l.b16 %v1997
  %v2158 = vunpack.c.l.b16 %v1998
  %v2159 = vunpack.c.l.b16 %v1999
  %v2160 = vunpack.c.l.b16 %v2000
  %v2161 = vunpack.c.l.b16 %v2001
  %v2162 = vunpack.c.l.b16 %v2002
  %v2163 = vunpack.c.l.b16 %v2003
  %v2164 = vunpack.c.l.b16 %v2004
  %v2165 = vunpack.c.l.b16 %v2005
  %v2166 = vunpack.c.l.b16 %v2006
  %v2167 = vunpack.c.l.b16 %v2007
  %v2168 = vunpack.c.l.b16 %v2008
  %v2169 = vunpack.c.l.b16 %v2009
  %v2170 = vunpack.c.l.b16 %v2010
  %v2171 = vunpack.c.l.b16 %v2011
  %v2172 = vunpack.c.l.b16 %v2012
  %v2173 = vunpack.c.l.b16 %v2013
  %v2174 = vunpack.c.l.b16 %v2014
  %v2175 = vunpack.c.l.b16 %v2015
  %v2176 = vunpack.c.l.b16 %v2016
  %v2177 = vunpack.c.l.b16 %v2017
  %v2178 = vunpack.c.l.b16 %v2018
  %v2179 = vunpack.c.l.b16 %v2019
  %v2180 = vunpack.c.l.b16 %v2020
  %v2181 = vunpack.c.l.b16 %v2021
  %v2182 = vunpack.c.l.b16 %v2022
  %v2183 = vunpack.c.l.b16 %v2023
  %v2184 = vunpack.c.l.b16 %v2024
  %v2185 = vunpack.c.l.b16 %v2025
  %v2186 = vunpack.c.l.b16 %v2026
  %v2187 = vunpack.c.l.b16 %v2027
  %v2188 = vunpack.c.l.b16 %v2028
  %v2189 = vunpack.c.l.b16 %v2029
  %v2190 = vunpack.c.l.b16 %v2030
  %v2191 = vunpack.c.l.b16 %v2031
  %v2192 = vunpack.c.l.b16 %v2032
  %v2193 = vunpack.c.l.b16 %v2033
  %v2194 = vunpack.c.l.b16 %v2034
  %v2195 = vunpack.c.l.b16 %v2035
  %v2196 = vunpack.c.l.b16 %v2036
  %v2197 = vunpack.c.l.b16 %v2037
  %v2198 = vunpack.c.l.b16 %v2038
  %v2199 = vpack.c.b16 %v2120, %v2119
  %v2200 = vpack.c.b16 %v2122, %v2121
  %v2201 = vpack.c.b16 %v2124, %v2123
  %v2202 = vpack.c.b16 %v2126, %v2125
  %v2203 = vpack.c.b16 %v2128, %v2127
  %v2204 = vpack.c.b16 %v2130, %v2129
  %v2205 = vpack.c.b16 %v2132, %v2131
  %v2206 = vpack.c.b16 %v2134, %v2133
  %v2207 = vpack.c.b16 %v2136, %v2135
  %v2208 = vpack.c.b16 %v2138, %v2137
  %v2209 = vpack.c.b16 %v2140, %v2139
  %v2210 = vpack.c.b16 %v2142, %v2141
  %v2211 = vpack.c.b16 %v2144, %v2143
  %v2212 = vpack.c.b16 %v2146, %v2145
  %v2213 = vpack.c.b16 %v2148, %v2147
  %v2214 = vpack.c.b16 %v2150, %v2149
  %v2215 = vpack.c.b16 %v2152, %v2151
  %v2216 = vpack.c.b16 %v2154, %v2153
  %v2217 = vpack.c.b16 %v2156, %v2155
  %v2218 = vpack.c.b16 %v2158, %v2157
  %v2219 = vpack.c.b16 %v2160, %v2159
  %v2220 = vpack.c.b16 %v2162, %v2161
  %v2221 = vpack.c.b16 %v2164, %v2163
  %v2222 = vpack.c.b16 %v2166, %v2165
  %v2223 = vpack.c.b16 %v2168, %v2167
  %v2224 = vpack.c.b16 %v2170, %v2169
  %v2225 = vpack.c.b16 %v2172, %v2171
  %v2226 = vpack.c.b16 %v2174, %v2173
  %v2227 = vpack.c.b16 %v2176, %v2175
  %v2228 = vpack.c.b16 %v2178, %v2177
  %v2229 = vpack.c.b16 %v2180, %v2179
  %v2230 = vpack.c.b16 %v2182, %v2181
  %v2231 = vpack.c.b16 %v2184, %v2183
  %v2232 = vpack.c.b16 %v2186, %v2185
  %v2233 = vpack.c.b16 %v2188, %v2187
  %v2234 = vpack.c.b16 %v2190, %v2189
  %v2235 = vpack.c.b16 %v2192, %v2191
  %v2236 = vpack.c.b16 %v2194, %v2193
  %v2237 = vpack.c.b16 %v2196, %v2195
  %v2238 = vpack.c.b16 %v2198, %v2197
  %2279 = vmatprep.subr.bf16.mxu0 0
  %2280 = vmatpush1.bf16.msra.mxu0 %v2199
  %2281 = vmatprep.subr.bf16.mxu0 0
  %2282 = vmatpush1.bf16.msra.mxu0 %v2200
  %2283 = vmatprep.subr.bf16.mxu0 0
  %2284 = vmatpush1.bf16.msra.mxu0 %v2201
  %2285 = vmatprep.subr.bf16.mxu0 0
  %2286 = vmatpush1.bf16.msra.mxu0 %v2202
  %2287 = vmatprep.subr.bf16.mxu0 0
  %2288 = vmatpush1.bf16.msra.mxu0 %v2203
  %2289 = vmatprep.subr.bf16.mxu0 0
  %2290 = vmatpush1.bf16.msra.mxu0 %v2204
  %2291 = vmatprep.subr.bf16.mxu0 0
  %2292 = vmatpush1.bf16.msra.mxu0 %v2205
  %2293 = vmatprep.subr.bf16.mxu0 0
  %2294 = vmatpush1.bf16.msra.mxu0 %v2206
  %2295 = vmatprep.subr.bf16.mxu0 0
  %2296 = vmatpush1.bf16.msra.mxu0 %v2207
  %2297 = vmatprep.subr.bf16.mxu0 0
  %2298 = vmatpush1.bf16.msra.mxu0 %v2208
  %2299 = vmatprep.subr.bf16.mxu0 0
  %2300 = vmatpush1.bf16.msra.mxu0 %v2209
  %2301 = vmatprep.subr.bf16.mxu0 0
  %2302 = vmatpush1.bf16.msra.mxu0 %v2210
  %2303 = vmatprep.subr.bf16.mxu0 0
  %2304 = vmatpush1.bf16.msra.mxu0 %v2211
  %2305 = vmatprep.subr.bf16.mxu0 0
  %2306 = vmatpush1.bf16.msra.mxu0 %v2212
  %2307 = vmatprep.subr.bf16.mxu0 0
  %2308 = vmatpush1.bf16.msra.mxu0 %v2213
  %2309 = vmatprep.subr.bf16.mxu0 0
  %2310 = vmatpush1.bf16.msra.mxu0 %v2214
  %2311 = vmatprep.mubr.bf16.mxu0 %v1955
  %2312 = vmatmul.mubr.bf16.gmra.mrb[0].mxu0 %v1954
  %v2313 = vpop.f32.mrb[0].mxu0
  %v2314 = vadd.f32 0.0, %v2313
  %v2315 = vpop.f32.mrb[0].mxu0
  %v2316 = vpop.f32.mrb[0].mxu0
  %v2317 = vpop.f32.mrb[0].mxu0
  %2318 = vdwg.mxu0
  %2319 = vmatprep.subr.bf16.mxu0 0
  %2320 = vmatpush1.bf16.msra.mxu0 %v2215
  %2321 = vmatprep.subr.bf16.mxu0 0
  %2322 = vmatpush1.bf16.msra.mxu0 %v2216
  %2323 = vmatprep.subr.bf16.mxu0 0
  %2324 = vmatpush1.bf16.msra.mxu0 %v2217
  %2325 = vmatprep.subr.bf16.mxu0 0
  %2326 = vmatpush1.bf16.msra.mxu0 %v2218
  %2327 = vmatprep.subr.bf16.mxu0 0
  %2328 = vmatpush1.bf16.msra.mxu0 %v2219
  %2329 = vmatprep.subr.bf16.mxu0 0
  %2330 = vmatpush1.bf16.msra.mxu0 %v2220
  %2331 = vmatprep.subr.bf16.mxu0 0
  %2332 = vmatpush1.bf16.msra.mxu0 %v2221
  %2333 = vmatprep.subr.bf16.mxu0 0
  %2334 = vmatpush1.bf16.msra.mxu0 %v2222
  %2335 = vmatprep.subr.bf16.mxu0 0
  %2336 = vmatpush1.bf16.msra.mxu0 %v2223
  %2337 = vmatprep.subr.bf16.mxu0 0
  %2338 = vmatpush1.bf16.msra.mxu0 %v2224
  %2339 = vmatprep.subr.bf16.mxu0 0
  %2340 = vmatpush1.bf16.msra.mxu0 %v2225
  %2341 = vmatprep.subr.bf16.mxu0 0
  %2342 = vmatpush1.bf16.msra.mxu0 %v2226
  %2343 = vmatprep.subr.bf16.mxu0 0
  %2344 = vmatpush1.bf16.msra.mxu0 %v2227
  %2345 = vmatprep.subr.bf16.mxu0 0
  %2346 = vmatpush1.bf16.msra.mxu0 %v2228
  %2347 = vmatprep.subr.bf16.mxu0 0
  %2348 = vmatpush1.bf16.msra.mxu0 %v2229
  %2349 = vmatprep.subr.bf16.mxu0 0
  %2350 = vmatpush1.bf16.msra.mxu0 %v2230
  %2351 = vmatprep.mubr.bf16.mxu0 %v1957
  %2352 = vmatmul.mubr.bf16.gmra.mrb[0].mxu0 %v1956
  %v2353 = vpop.f32.mrb[0].mxu0
  %v2354 = vadd.f32 %v2314, %v2353
  %v2355 = vpop.f32.mrb[0].mxu0
  %v2356 = vpop.f32.mrb[0].mxu0
  %v2357 = vpop.f32.mrb[0].mxu0
  %2358 = vdwg.mxu0
  %2359 = vmatprep.subr.bf16.mxu0 0
  %2360 = vmatpush1.bf16.msra.mxu0 %v2231
  %2361 = vmatprep.subr.bf16.mxu0 0
  %2362 = vmatpush1.bf16.msra.mxu0 %v2232
  %2363 = vmatprep.subr.bf16.mxu0 0
  %2364 = vmatpush1.bf16.msra.mxu0 %v2233
  %2365 = vmatprep.subr.bf16.mxu0 0
  %2366 = vmatpush1.bf16.msra.mxu0 %v2234
  %2367 = vmatprep.subr.bf16.mxu0 0
  %2368 = vmatpush1.bf16.msra.mxu0 %v2235
  %2369 = vmatprep.subr.bf16.mxu0 0
  %2370 = vmatpush1.bf16.msra.mxu0 %v2236
  %2371 = vmatprep.subr.bf16.mxu0 0
  %2372 = vmatpush1.bf16.msra.mxu0 %v2237
  %2373 = vmatprep.subr.bf16.mxu0 0
  %2374 = vmatpush1.bf16.msra.mxu0 %v2238
  %2375 = vmatprep.subr.bf16.mxu0 0
  %2376 = vmatpush1.bf16.msra.mxu0 0
  %2377 = vmatprep.subr.bf16.mxu0 0
  %2378 = vmatpush1.bf16.msra.mxu0 0
  %2379 = vmatprep.subr.bf16.mxu0 0
  %2380 = vmatpush1.bf16.msra.mxu0 0
  %2381 = vmatprep.subr.bf16.mxu0 0
  %2382 = vmatpush1.bf16.msra.mxu0 0
  %2383 = vmatprep.subr.bf16.mxu0 0
  %2384 = vmatpush1.bf16.msra.mxu0 0
  %2385 = vmatprep.subr.bf16.mxu0 0
  %2386 = vmatpush1.bf16.msra.mxu0 0
  %2387 = vmatprep.subr.bf16.mxu0 0
  %2388 = vmatpush1.bf16.msra.mxu0 0
  %2389 = vmatprep.subr.bf16.mxu0 0
  %2390 = vmatpush1.bf16.msra.mxu0 0
  %2391 = vmatprep.mubr.bf16.mxu0 0
  %2392 = vmatmul.mubr.bf16.gmra.mrb[0].mxu0 %v1958
  %v2393 = vpop.f32.mrb[0].mxu0
  %v2394 = vadd.f32 %v2354, %v2393
  %v2395 = vpop.f32.mrb[0].mxu0
  %v2396 = vpop.f32.mrb[0].mxu0
  %v2397 = vpop.f32.mrb[0].mxu0
  %2398 = vdwg.mxu0
  %v2399 = vadd.f32 %v1807, %v2394
  %v2400 = vld [vmem:[%s2 + $0x14] sm:$0x1f]
  %s2401 = scalar_lea.vmem %s1, 80
  %v2402 = vld [vmem:[%s2401] ss:$4 sm:$0x1f]
  %v2404 = vlaneseq
  %v2405 = vshrl.u32 %v2404, 7
  %v2406 = vsub.s32 0, %v2405
  %v2407 = vrot.slane %v2402, %v2406
  %v2408 = vlaneseq
  %v2409 = vshrl.u32 %v2408, 7
  %v2410 = vsub.s32 1, %v2409
  %v2411 = vrot.slane %v2402, %v2410
  %v2412 = vlaneseq
  %v2413 = vshrl.u32 %v2412, 7
  %v2414 = vsub.s32 2, %v2413
  %v2415 = vrot.slane %v2402, %v2414
  %v2416 = vlaneseq
  %v2417 = vshrl.u32 %v2416, 7
  %v2418 = vsub.s32 3, %v2417
  %v2419 = vrot.slane %v2402, %v2418
  %v2420 = vlaneseq
  %v2421 = vshrl.u32 %v2420, 7
  %v2422 = vsub.s32 4, %v2421
  %v2423 = vrot.slane %v2402, %v2422
  %v2429 = vmul.f32 %v27, %v2407
  %v2430 = vmul.f32 %v27, %v2411
  %v2431 = vmul.f32 %v27, %v2415
  %v2432 = vmul.f32 %v27, %v2419
  %v2433 = vmul.f32 %v27, %v2423
  %v2435 = vlaneseq
  %v2436 = vshrl.u32 %v2435, 7
  %v2437 = vsub.s32 0, %v2436
  %v2438 = vrot.slane %v2400, %v2437
  %v2439 = vlaneseq
  %v2440 = vshrl.u32 %v2439, 7
  %v2441 = vsub.s32 1, %v2440
  %v2442 = vrot.slane %v2400, %v2441
  %v2443 = vlaneseq
  %v2444 = vshrl.u32 %v2443, 7
  %v2445 = vsub.s32 2, %v2444
  %v2446 = vrot.slane %v2400, %v2445
  %v2447 = vlaneseq
  %v2448 = vshrl.u32 %v2447, 7
  %v2449 = vsub.s32 3, %v2448
  %v2450 = vrot.slane %v2400, %v2449
  %v2451 = vlaneseq
  %v2452 = vshrl.u32 %v2451, 7
  %v2453 = vsub.s32 4, %v2452
  %v2454 = vrot.slane %v2400, %v2453
  %v2460 = vadd.f32 %v2438, %v2429
  %v2461 = vadd.f32 %v2442, %v2430
  %v2462 = vadd.f32 %v2446, %v2431
  %v2463 = vadd.f32 %v2450, %v2432
  %v2464 = vadd.f32 %v2454, %v2433
  %s2465 = scalar_lea.vmem %s1, 81
  %v2466 = vld [vmem:[%s2465] ss:$4 sm:$0x1f]
  %v2468 = vlaneseq
  %v2469 = vshrl.u32 %v2468, 7
  %v2470 = vsub.s32 0, %v2469
  %v2471 = vrot.slane %v2466, %v2470
  %v2472 = vlaneseq
  %v2473 = vshrl.u32 %v2472, 7
  %v2474 = vsub.s32 1, %v2473
  %v2475 = vrot.slane %v2466, %v2474
  %v2476 = vlaneseq
  %v2477 = vshrl.u32 %v2476, 7
  %v2478 = vsub.s32 2, %v2477
  %v2479 = vrot.slane %v2466, %v2478
  %v2480 = vlaneseq
  %v2481 = vshrl.u32 %v2480, 7
  %v2482 = vsub.s32 3, %v2481
  %v2483 = vrot.slane %v2466, %v2482
  %v2484 = vlaneseq
  %v2485 = vshrl.u32 %v2484, 7
  %v2486 = vsub.s32 4, %v2485
  %v2487 = vrot.slane %v2466, %v2486
  %v2493 = vmul.f32 %v95, %v2471
  %v2494 = vmul.f32 %v95, %v2475
  %v2495 = vmul.f32 %v95, %v2479
  %v2496 = vmul.f32 %v95, %v2483
  %v2497 = vmul.f32 %v95, %v2487
  %v2498 = vadd.f32 %v2460, %v2493
  %v2499 = vadd.f32 %v2461, %v2494
  %v2500 = vadd.f32 %v2462, %v2495
  %v2501 = vadd.f32 %v2463, %v2496
  %v2502 = vadd.f32 %v2464, %v2497
  %s2503 = scalar_lea.vmem %s1, 82
  %v2504 = vld [vmem:[%s2503] ss:$4 sm:$0x1f]
  %v2506 = vlaneseq
  %v2507 = vshrl.u32 %v2506, 7
  %v2508 = vsub.s32 0, %v2507
  %v2509 = vrot.slane %v2504, %v2508
  %v2510 = vlaneseq
  %v2511 = vshrl.u32 %v2510, 7
  %v2512 = vsub.s32 1, %v2511
  %v2513 = vrot.slane %v2504, %v2512
  %v2514 = vlaneseq
  %v2515 = vshrl.u32 %v2514, 7
  %v2516 = vsub.s32 2, %v2515
  %v2517 = vrot.slane %v2504, %v2516
  %v2518 = vlaneseq
  %v2519 = vshrl.u32 %v2518, 7
  %v2520 = vsub.s32 3, %v2519
  %v2521 = vrot.slane %v2504, %v2520
  %v2522 = vlaneseq
  %v2523 = vshrl.u32 %v2522, 7
  %v2524 = vsub.s32 4, %v2523
  %v2525 = vrot.slane %v2504, %v2524
  %v2531 = vmul.f32 %v137, %v2509
  %v2532 = vmul.f32 %v137, %v2513
  %v2533 = vmul.f32 %v137, %v2517
  %v2534 = vmul.f32 %v137, %v2521
  %v2535 = vmul.f32 %v137, %v2525
  %v2536 = vadd.f32 %v2498, %v2531
  %v2537 = vadd.f32 %v2499, %v2532
  %v2538 = vadd.f32 %v2500, %v2533
  %v2539 = vadd.f32 %v2501, %v2534
  %v2540 = vadd.f32 %v2502, %v2535
  %v2541 = vmax.f32 %v2536, 0.0
  %v2542 = vmax.f32 %v2537, 0.0
  %v2543 = vmax.f32 %v2538, 0.0
  %v2544 = vmax.f32 %v2539, 0.0
  %v2545 = vmax.f32 %v2540, 0.0
  %v2546 = vpack.c.bf16 %v2541, %v2541
  %v2547 = vpack.c.bf16 %v2542, %v2542
  %v2548 = vpack.c.bf16 %v2543, %v2543
  %v2549 = vpack.c.bf16 %v2544, %v2544
  %v2550 = vpack.c.bf16 %v2545, %v2545
  %v2551 = vld [vmem:[%s3 + $0x500] sm:$0xf]
  %v2552 = vld [vmem:[%s3 + $0x504] sm:$0xf]
  %v2553 = vld [vmem:[%s3 + $0x508] sm:$0xf]
  %v2554 = vld [vmem:[%s3 + $0x50c] sm:$0xf]
  %v2555 = vld [vmem:[%s3 + $0x510] sm:$0xf]
  %v2556 = vld [vmem:[%s3 + $0x514] sm:$0xf]
  %v2557 = vld [vmem:[%s3 + $0x518] sm:$0xf]
  %v2558 = vld [vmem:[%s3 + $0x51c] sm:$0xf]
  %v2559 = vld [vmem:[%s3 + $0x520] sm:$0xf]
  %v2560 = vld [vmem:[%s3 + $0x524] sm:$0xf]
  %v2561 = vld [vmem:[%s3 + $0x528] sm:$0xf]
  %v2562 = vld [vmem:[%s3 + $0x52c] sm:$0xf]
  %v2563 = vld [vmem:[%s3 + $0x530] sm:$0xf]
  %v2564 = vld [vmem:[%s3 + $0x534] sm:$0xf]
  %v2565 = vld [vmem:[%s3 + $0x538] sm:$0xf]
  %v2566 = vld [vmem:[%s3 + $0x53c] sm:$0xf]
  %v2567 = vld [vmem:[%s3 + $0x540] sm:$0xf]
  %v2568 = vld [vmem:[%s3 + $0x544] sm:$0xf]
  %v2569 = vld [vmem:[%s3 + $0x548] sm:$0xf]
  %v2570 = vld [vmem:[%s3 + $0x54c] sm:$0xf]
  %v2571 = vld [vmem:[%s3 + $0x550] sm:$0xf]
  %v2572 = vld [vmem:[%s3 + $0x554] sm:$0xf]
  %v2573 = vld [vmem:[%s3 + $0x558] sm:$0xf]
  %v2574 = vld [vmem:[%s3 + $0x55c] sm:$0xf]
  %v2575 = vld [vmem:[%s3 + $0x560] sm:$0xf]
  %v2576 = vld [vmem:[%s3 + $0x564] sm:$0xf]
  %v2577 = vld [vmem:[%s3 + $0x568] sm:$0xf]
  %v2578 = vld [vmem:[%s3 + $0x56c] sm:$0xf]
  %v2579 = vld [vmem:[%s3 + $0x570] sm:$0xf]
  %v2580 = vld [vmem:[%s3 + $0x574] sm:$0xf]
  %v2581 = vld [vmem:[%s3 + $0x578] sm:$0xf]
  %v2582 = vld [vmem:[%s3 + $0x57c] sm:$0xf]
  %v2583 = vld [vmem:[%s3 + $0x580] sm:$0xf]
  %v2584 = vld [vmem:[%s3 + $0x584] sm:$0xf]
  %v2585 = vld [vmem:[%s3 + $0x588] sm:$0xf]
  %v2586 = vld [vmem:[%s3 + $0x58c] sm:$0xf]
  %v2587 = vld [vmem:[%s3 + $0x590] sm:$0xf]
  %v2588 = vld [vmem:[%s3 + $0x594] sm:$0xf]
  %v2589 = vld [vmem:[%s3 + $0x598] sm:$0xf]
  %v2590 = vld [vmem:[%s3 + $0x59c] sm:$0xf]
  %v2591 = vld [vmem:[%s3 + $0x5a0] sm:$0xf]
  %v2592 = vld [vmem:[%s3 + $0x5a4] sm:$0xf]
  %v2593 = vld [vmem:[%s3 + $0x5a8] sm:$0xf]
  %v2594 = vld [vmem:[%s3 + $0x5ac] sm:$0xf]
  %v2595 = vld [vmem:[%s3 + $0x5b0] sm:$0xf]
  %v2596 = vld [vmem:[%s3 + $0x5b4] sm:$0xf]
  %v2597 = vld [vmem:[%s3 + $0x5b8] sm:$0xf]
  %v2598 = vld [vmem:[%s3 + $0x5bc] sm:$0xf]
  %v2599 = vld [vmem:[%s3 + $0x5c0] sm:$0xf]
  %v2600 = vld [vmem:[%s3 + $0x5c4] sm:$0xf]
  %v2601 = vld [vmem:[%s3 + $0x5c8] sm:$0xf]
  %v2602 = vld [vmem:[%s3 + $0x5cc] sm:$0xf]
  %v2603 = vld [vmem:[%s3 + $0x5d0] sm:$0xf]
  %v2604 = vld [vmem:[%s3 + $0x5d4] sm:$0xf]
  %v2605 = vld [vmem:[%s3 + $0x5d8] sm:$0xf]
  %v2606 = vld [vmem:[%s3 + $0x5dc] sm:$0xf]
  %v2607 = vld [vmem:[%s3 + $0x5e0] sm:$0xf]
  %v2608 = vld [vmem:[%s3 + $0x5e4] sm:$0xf]
  %v2609 = vld [vmem:[%s3 + $0x5e8] sm:$0xf]
  %v2610 = vld [vmem:[%s3 + $0x5ec] sm:$0xf]
  %v2611 = vld [vmem:[%s3 + $0x5f0] sm:$0xf]
  %v2612 = vld [vmem:[%s3 + $0x5f4] sm:$0xf]
  %v2613 = vld [vmem:[%s3 + $0x5f8] sm:$0xf]
  %v2614 = vld [vmem:[%s3 + $0x5fc] sm:$0xf]
  %v2615 = vld [vmem:[%s3 + $0x600] sm:$0xf]
  %v2616 = vld [vmem:[%s3 + $0x604] sm:$0xf]
  %v2617 = vld [vmem:[%s3 + $0x608] sm:$0xf]
  %v2618 = vld [vmem:[%s3 + $0x60c] sm:$0xf]
  %v2619 = vld [vmem:[%s3 + $0x610] sm:$0xf]
  %v2620 = vld [vmem:[%s3 + $0x614] sm:$0xf]
  %v2621 = vld [vmem:[%s3 + $0x618] sm:$0xf]
  %v2622 = vld [vmem:[%s3 + $0x61c] sm:$0xf]
  %v2623 = vld [vmem:[%s3 + $0x620] sm:$0xf]
  %v2624 = vld [vmem:[%s3 + $0x624] sm:$0xf]
  %v2625 = vld [vmem:[%s3 + $0x628] sm:$0xf]
  %v2626 = vld [vmem:[%s3 + $0x62c] sm:$0xf]
  %v2627 = vld [vmem:[%s3 + $0x630] sm:$0xf]
  %v2628 = vld [vmem:[%s3 + $0x634] sm:$0xf]
  %v2629 = vld [vmem:[%s3 + $0x638] sm:$0xf]
  %v2630 = vld [vmem:[%s3 + $0x63c] sm:$0xf]
  %v2711 = vunpack.c.l.b16 %v2551
  %v2712 = vunpack.c.l.b16 %v2552
  %v2713 = vunpack.c.l.b16 %v2553
  %v2714 = vunpack.c.l.b16 %v2554
  %v2715 = vunpack.c.l.b16 %v2555
  %v2716 = vunpack.c.l.b16 %v2556
  %v2717 = vunpack.c.l.b16 %v2557
  %v2718 = vunpack.c.l.b16 %v2558
  %v2719 = vunpack.c.l.b16 %v2559
  %v2720 = vunpack.c.l.b16 %v2560
  %v2721 = vunpack.c.l.b16 %v2561
  %v2722 = vunpack.c.l.b16 %v2562
  %v2723 = vunpack.c.l.b16 %v2563
  %v2724 = vunpack.c.l.b16 %v2564
  %v2725 = vunpack.c.l.b16 %v2565
  %v2726 = vunpack.c.l.b16 %v2566
  %v2727 = vunpack.c.l.b16 %v2567
  %v2728 = vunpack.c.l.b16 %v2568
  %v2729 = vunpack.c.l.b16 %v2569
  %v2730 = vunpack.c.l.b16 %v2570
  %v2731 = vunpack.c.l.b16 %v2571
  %v2732 = vunpack.c.l.b16 %v2572
  %v2733 = vunpack.c.l.b16 %v2573
  %v2734 = vunpack.c.l.b16 %v2574
  %v2735 = vunpack.c.l.b16 %v2575
  %v2736 = vunpack.c.l.b16 %v2576
  %v2737 = vunpack.c.l.b16 %v2577
  %v2738 = vunpack.c.l.b16 %v2578
  %v2739 = vunpack.c.l.b16 %v2579
  %v2740 = vunpack.c.l.b16 %v2580
  %v2741 = vunpack.c.l.b16 %v2581
  %v2742 = vunpack.c.l.b16 %v2582
  %v2743 = vunpack.c.l.b16 %v2583
  %v2744 = vunpack.c.l.b16 %v2584
  %v2745 = vunpack.c.l.b16 %v2585
  %v2746 = vunpack.c.l.b16 %v2586
  %v2747 = vunpack.c.l.b16 %v2587
  %v2748 = vunpack.c.l.b16 %v2588
  %v2749 = vunpack.c.l.b16 %v2589
  %v2750 = vunpack.c.l.b16 %v2590
  %v2751 = vunpack.c.l.b16 %v2591
  %v2752 = vunpack.c.l.b16 %v2592
  %v2753 = vunpack.c.l.b16 %v2593
  %v2754 = vunpack.c.l.b16 %v2594
  %v2755 = vunpack.c.l.b16 %v2595
  %v2756 = vunpack.c.l.b16 %v2596
  %v2757 = vunpack.c.l.b16 %v2597
  %v2758 = vunpack.c.l.b16 %v2598
  %v2759 = vunpack.c.l.b16 %v2599
  %v2760 = vunpack.c.l.b16 %v2600
  %v2761 = vunpack.c.l.b16 %v2601
  %v2762 = vunpack.c.l.b16 %v2602
  %v2763 = vunpack.c.l.b16 %v2603
  %v2764 = vunpack.c.l.b16 %v2604
  %v2765 = vunpack.c.l.b16 %v2605
  %v2766 = vunpack.c.l.b16 %v2606
  %v2767 = vunpack.c.l.b16 %v2607
  %v2768 = vunpack.c.l.b16 %v2608
  %v2769 = vunpack.c.l.b16 %v2609
  %v2770 = vunpack.c.l.b16 %v2610
  %v2771 = vunpack.c.l.b16 %v2611
  %v2772 = vunpack.c.l.b16 %v2612
  %v2773 = vunpack.c.l.b16 %v2613
  %v2774 = vunpack.c.l.b16 %v2614
  %v2775 = vunpack.c.l.b16 %v2615
  %v2776 = vunpack.c.l.b16 %v2616
  %v2777 = vunpack.c.l.b16 %v2617
  %v2778 = vunpack.c.l.b16 %v2618
  %v2779 = vunpack.c.l.b16 %v2619
  %v2780 = vunpack.c.l.b16 %v2620
  %v2781 = vunpack.c.l.b16 %v2621
  %v2782 = vunpack.c.l.b16 %v2622
  %v2783 = vunpack.c.l.b16 %v2623
  %v2784 = vunpack.c.l.b16 %v2624
  %v2785 = vunpack.c.l.b16 %v2625
  %v2786 = vunpack.c.l.b16 %v2626
  %v2787 = vunpack.c.l.b16 %v2627
  %v2788 = vunpack.c.l.b16 %v2628
  %v2789 = vunpack.c.l.b16 %v2629
  %v2790 = vunpack.c.l.b16 %v2630
  %v2791 = vpack.c.b16 %v2712, %v2711
  %v2792 = vpack.c.b16 %v2714, %v2713
  %v2793 = vpack.c.b16 %v2716, %v2715
  %v2794 = vpack.c.b16 %v2718, %v2717
  %v2795 = vpack.c.b16 %v2720, %v2719
  %v2796 = vpack.c.b16 %v2722, %v2721
  %v2797 = vpack.c.b16 %v2724, %v2723
  %v2798 = vpack.c.b16 %v2726, %v2725
  %v2799 = vpack.c.b16 %v2728, %v2727
  %v2800 = vpack.c.b16 %v2730, %v2729
  %v2801 = vpack.c.b16 %v2732, %v2731
  %v2802 = vpack.c.b16 %v2734, %v2733
  %v2803 = vpack.c.b16 %v2736, %v2735
  %v2804 = vpack.c.b16 %v2738, %v2737
  %v2805 = vpack.c.b16 %v2740, %v2739
  %v2806 = vpack.c.b16 %v2742, %v2741
  %v2807 = vpack.c.b16 %v2744, %v2743
  %v2808 = vpack.c.b16 %v2746, %v2745
  %v2809 = vpack.c.b16 %v2748, %v2747
  %v2810 = vpack.c.b16 %v2750, %v2749
  %v2811 = vpack.c.b16 %v2752, %v2751
  %v2812 = vpack.c.b16 %v2754, %v2753
  %v2813 = vpack.c.b16 %v2756, %v2755
  %v2814 = vpack.c.b16 %v2758, %v2757
  %v2815 = vpack.c.b16 %v2760, %v2759
  %v2816 = vpack.c.b16 %v2762, %v2761
  %v2817 = vpack.c.b16 %v2764, %v2763
  %v2818 = vpack.c.b16 %v2766, %v2765
  %v2819 = vpack.c.b16 %v2768, %v2767
  %v2820 = vpack.c.b16 %v2770, %v2769
  %v2821 = vpack.c.b16 %v2772, %v2771
  %v2822 = vpack.c.b16 %v2774, %v2773
  %v2823 = vpack.c.b16 %v2776, %v2775
  %v2824 = vpack.c.b16 %v2778, %v2777
  %v2825 = vpack.c.b16 %v2780, %v2779
  %v2826 = vpack.c.b16 %v2782, %v2781
  %v2827 = vpack.c.b16 %v2784, %v2783
  %v2828 = vpack.c.b16 %v2786, %v2785
  %v2829 = vpack.c.b16 %v2788, %v2787
  %v2830 = vpack.c.b16 %v2790, %v2789
  %2871 = vmatprep.subr.bf16.mxu0 0
  %2872 = vmatpush1.bf16.msra.mxu0 %v2791
  %2873 = vmatprep.subr.bf16.mxu0 0
  %2874 = vmatpush1.bf16.msra.mxu0 %v2792
  %2875 = vmatprep.subr.bf16.mxu0 0
  %2876 = vmatpush1.bf16.msra.mxu0 %v2793
  %2877 = vmatprep.subr.bf16.mxu0 0
  %2878 = vmatpush1.bf16.msra.mxu0 %v2794
  %2879 = vmatprep.subr.bf16.mxu0 0
  %2880 = vmatpush1.bf16.msra.mxu0 %v2795
  %2881 = vmatprep.subr.bf16.mxu0 0
  %2882 = vmatpush1.bf16.msra.mxu0 %v2796
  %2883 = vmatprep.subr.bf16.mxu0 0
  %2884 = vmatpush1.bf16.msra.mxu0 %v2797
  %2885 = vmatprep.subr.bf16.mxu0 0
  %2886 = vmatpush1.bf16.msra.mxu0 %v2798
  %2887 = vmatprep.subr.bf16.mxu0 0
  %2888 = vmatpush1.bf16.msra.mxu0 %v2799
  %2889 = vmatprep.subr.bf16.mxu0 0
  %2890 = vmatpush1.bf16.msra.mxu0 %v2800
  %2891 = vmatprep.subr.bf16.mxu0 0
  %2892 = vmatpush1.bf16.msra.mxu0 %v2801
  %2893 = vmatprep.subr.bf16.mxu0 0
  %2894 = vmatpush1.bf16.msra.mxu0 %v2802
  %2895 = vmatprep.subr.bf16.mxu0 0
  %2896 = vmatpush1.bf16.msra.mxu0 %v2803
  %2897 = vmatprep.subr.bf16.mxu0 0
  %2898 = vmatpush1.bf16.msra.mxu0 %v2804
  %2899 = vmatprep.subr.bf16.mxu0 0
  %2900 = vmatpush1.bf16.msra.mxu0 %v2805
  %2901 = vmatprep.subr.bf16.mxu0 0
  %2902 = vmatpush1.bf16.msra.mxu0 %v2806
  %2903 = vmatprep.mubr.bf16.mxu0 %v2547
  %2904 = vmatmul.mubr.bf16.gmra.mrb[0].mxu0 %v2546
  %v2905 = vpop.f32.mrb[0].mxu0
  %v2906 = vadd.f32 0.0, %v2905
  %v2907 = vpop.f32.mrb[0].mxu0
  %v2908 = vpop.f32.mrb[0].mxu0
  %v2909 = vpop.f32.mrb[0].mxu0
  %2910 = vdwg.mxu0
  %2911 = vmatprep.subr.bf16.mxu0 0
  %2912 = vmatpush1.bf16.msra.mxu0 %v2807
  %2913 = vmatprep.subr.bf16.mxu0 0
  %2914 = vmatpush1.bf16.msra.mxu0 %v2808
  %2915 = vmatprep.subr.bf16.mxu0 0
  %2916 = vmatpush1.bf16.msra.mxu0 %v2809
  %2917 = vmatprep.subr.bf16.mxu0 0
  %2918 = vmatpush1.bf16.msra.mxu0 %v2810
  %2919 = vmatprep.subr.bf16.mxu0 0
  %2920 = vmatpush1.bf16.msra.mxu0 %v2811
  %2921 = vmatprep.subr.bf16.mxu0 0
  %2922 = vmatpush1.bf16.msra.mxu0 %v2812
  %2923 = vmatprep.subr.bf16.mxu0 0
  %2924 = vmatpush1.bf16.msra.mxu0 %v2813
  %2925 = vmatprep.subr.bf16.mxu0 0
  %2926 = vmatpush1.bf16.msra.mxu0 %v2814
  %2927 = vmatprep.subr.bf16.mxu0 0
  %2928 = vmatpush1.bf16.msra.mxu0 %v2815
  %2929 = vmatprep.subr.bf16.mxu0 0
  %2930 = vmatpush1.bf16.msra.mxu0 %v2816
  %2931 = vmatprep.subr.bf16.mxu0 0
  %2932 = vmatpush1.bf16.msra.mxu0 %v2817
  %2933 = vmatprep.subr.bf16.mxu0 0
  %2934 = vmatpush1.bf16.msra.mxu0 %v2818
  %2935 = vmatprep.subr.bf16.mxu0 0
  %2936 = vmatpush1.bf16.msra.mxu0 %v2819
  %2937 = vmatprep.subr.bf16.mxu0 0
  %2938 = vmatpush1.bf16.msra.mxu0 %v2820
  %2939 = vmatprep.subr.bf16.mxu0 0
  %2940 = vmatpush1.bf16.msra.mxu0 %v2821
  %2941 = vmatprep.subr.bf16.mxu0 0
  %2942 = vmatpush1.bf16.msra.mxu0 %v2822
  %2943 = vmatprep.mubr.bf16.mxu0 %v2549
  %2944 = vmatmul.mubr.bf16.gmra.mrb[0].mxu0 %v2548
  %v2945 = vpop.f32.mrb[0].mxu0
  %v2946 = vadd.f32 %v2906, %v2945
  %v2947 = vpop.f32.mrb[0].mxu0
  %v2948 = vpop.f32.mrb[0].mxu0
  %v2949 = vpop.f32.mrb[0].mxu0
  %2950 = vdwg.mxu0
  %2951 = vmatprep.subr.bf16.mxu0 0
  %2952 = vmatpush1.bf16.msra.mxu0 %v2823
  %2953 = vmatprep.subr.bf16.mxu0 0
  %2954 = vmatpush1.bf16.msra.mxu0 %v2824
  %2955 = vmatprep.subr.bf16.mxu0 0
  %2956 = vmatpush1.bf16.msra.mxu0 %v2825
  %2957 = vmatprep.subr.bf16.mxu0 0
  %2958 = vmatpush1.bf16.msra.mxu0 %v2826
  %2959 = vmatprep.subr.bf16.mxu0 0
  %2960 = vmatpush1.bf16.msra.mxu0 %v2827
  %2961 = vmatprep.subr.bf16.mxu0 0
  %2962 = vmatpush1.bf16.msra.mxu0 %v2828
  %2963 = vmatprep.subr.bf16.mxu0 0
  %2964 = vmatpush1.bf16.msra.mxu0 %v2829
  %2965 = vmatprep.subr.bf16.mxu0 0
  %2966 = vmatpush1.bf16.msra.mxu0 %v2830
  %2967 = vmatprep.subr.bf16.mxu0 0
  %2968 = vmatpush1.bf16.msra.mxu0 0
  %2969 = vmatprep.subr.bf16.mxu0 0
  %2970 = vmatpush1.bf16.msra.mxu0 0
  %2971 = vmatprep.subr.bf16.mxu0 0
  %2972 = vmatpush1.bf16.msra.mxu0 0
  %2973 = vmatprep.subr.bf16.mxu0 0
  %2974 = vmatpush1.bf16.msra.mxu0 0
  %2975 = vmatprep.subr.bf16.mxu0 0
  %2976 = vmatpush1.bf16.msra.mxu0 0
  %2977 = vmatprep.subr.bf16.mxu0 0
  %2978 = vmatpush1.bf16.msra.mxu0 0
  %2979 = vmatprep.subr.bf16.mxu0 0
  %2980 = vmatpush1.bf16.msra.mxu0 0
  %2981 = vmatprep.subr.bf16.mxu0 0
  %2982 = vmatpush1.bf16.msra.mxu0 0
  %2983 = vmatprep.mubr.bf16.mxu0 0
  %2984 = vmatmul.mubr.bf16.gmra.mrb[0].mxu0 %v2550
  %v2985 = vpop.f32.mrb[0].mxu0
  %v2986 = vadd.f32 %v2946, %v2985
  %v2987 = vpop.f32.mrb[0].mxu0
  %v2988 = vpop.f32.mrb[0].mxu0
  %v2989 = vpop.f32.mrb[0].mxu0
  %2990 = vdwg.mxu0
  %v2991 = vadd.f32 %v2399, %v2986
  %v2992 = vld [vmem:[%s4] sm:$0x1]
  %v2994 = vlaneseq
  %v2995 = vshrl.u32 %v2994, 7
  %v2996 = vsub.s32 0, %v2995
  %v2997 = vrot.slane %v2992, %v2996
  %v2999 = vadd.f32 %v2991, %v2997
  %3000 = vmax.xlane.f32.xlu0 %v2999
  %v3001 = vpop.xlane.xlu0 %3000
  %v3002 = vsub.f32 %v2999, %v3001
  %v3003 = vmul.f32 %v3002, 1.442695
  %v3004 = vpow.pop %v3003
  %3005 = vadd.xlane.f32.xlu0 %v3004
  %v3006 = vpop.xlane.xlu0 %3005
  %v3007 = vrcp.pop %v3006
  %v3008 = vmul.f32 %v3004, %v3007
  %3009 = vst [vmem:[%s5] sm:$0xff] %v3008
  // Predicated region
  $region22: #{embedding_decoder_forward.1} parent=0 // pred_check
    _
  $region23: #{embedding_decoder_forward.1} parent=0 // pred_check_branch
    %3011 = sbr.rel (0) target = $region25
  $region24: #{embedding_decoder_forward.1} parent=0 // pred_region
    _
  $region25: #{embedding_decoder_forward.1} parent=0 // pred_fallthru
    _
  // Predicated region
  $region26: #{embedding_decoder_forward.1} parent=0 // pred_check
    _
  $region27: #{embedding_decoder_forward.1} parent=0 // pred_check_branch
    %3013 = sbr.rel (0) target = $region29
  $region28: #{embedding_decoder_forward.1} parent=0 // pred_region
    _
  $region29: #{embedding_decoder_forward.1} parent=0 // pred_fallthru
    _

</llo_original>
